<compile_context>
chip_gen: v6e
topology: v6e:2x2x1
jax: 0.10.0
libtpu: 0.0.40
codegen_flags: <defaults>
</compile_context>

<pallas_src>
import jax
import jax.numpy as jnp
from jax.experimental import pallas as pl
from jax.experimental.pallas import tpu as pltpu  # noqa: F401  (TPU backend extensions)


# ----------------------------- Pallas kernel ------------------------------ #
def _lstm_mlp_kernel(x_ref, wx1_ref, wh1_ref, b1_ref, w2_ref, b2_ref,
                     fc1w_ref, fc1b_ref, fc2w_ref, fc2b_ref,
                     fclw_ref, fclb_ref, out_ref):
    B, T, D = x_ref.shape
    H1 = wh1_ref.shape[0]
    H2 = w2_ref.shape[1] // 4

    # ---- layer-1 input projections for all timesteps: one MXU push -------- #
    x_flat = x_ref[...].reshape(B * T, D)                       # (B*T, D)
    xproj = (jnp.dot(x_flat, wx1_ref[...],
                     preferred_element_type=jnp.float32)
             + b1_ref[...])                                     # (B*T, 4H1)
    xproj = xproj.reshape(B, T, 4 * H1)

    # Hoist weight loads / bias broadcast out of the unrolled recurrence.
    wh1 = wh1_ref[...]                                          # (H1, 4H1)
    w2 = w2_ref[...]                                            # (H1+H2, 4H2)
    b2 = jnp.broadcast_to(b2_ref[...], (B, 4 * H2))             # hoisted bcast

    def gates_to_hc(gates, c, H):
        # Gate order is [i, f, o, g] (pre-reordered at pack time): one
        # full-vreg sigmoid + one full-vreg tanh over (B, 4H).
        sig = jax.nn.sigmoid(gates)
        tnh = jnp.tanh(gates)
        i = sig[:, 0 * H:1 * H]
        f = sig[:, 1 * H:2 * H]
        o = sig[:, 2 * H:3 * H]
        g = tnh[:, 3 * H:4 * H]
        c_new = f * c + i * g
        h_new = o * jnp.tanh(c_new)
        return h_new, c_new

    h1 = jnp.zeros((B, H1), jnp.float32)
    c1 = jnp.zeros((B, H1), jnp.float32)
    h2 = jnp.zeros((B, H2), jnp.float32)
    c2 = jnp.zeros((B, H2), jnp.float32)

    # Fully unrolled recurrence over T (static, small trip count).
    for t in range(T):
        # LSTM layer 1: recurrent matmul only (input part precomputed above).
        g1 = xproj[:, t, :] + jnp.dot(h1, wh1,
                                      preferred_element_type=jnp.float32)
        h1, c1 = gates_to_hc(g1, c1, H1)
        # LSTM layer 2: fused input+recurrent matmul, one MXU push.
        xh2 = jnp.concatenate([h1, h2], axis=1)                 # (B, H1+H2)
        g2 = jnp.dot(xh2, w2, preferred_element_type=jnp.float32) + b2
        h2, c2 = gates_to_hc(g2, c2, H2)

    # ---- FC head on the last-timestep hidden state of lstm2 --------------- #
    z = jnp.maximum(
        jnp.dot(h2, fc1w_ref[...], preferred_element_type=jnp.float32)
        + fc1b_ref[...], 0.0)
    # drop1: eval mode -> identity
    z = jnp.maximum(
        jnp.dot(z, fc2w_ref[...], preferred_element_type=jnp.float32)
        + fc2b_ref[...], 0.0)
    # drop2: eval mode -> identity
    # Raw regression output (no softmax), matching the PyTorch module.
    # NOTE: OUTPUT_DIM=4 => a single masked (non lane-dense) store; negligible
    # here (one store total).
    out_ref[...] = (jnp.dot(z, fclw_ref[...], preferred_element_type=jnp.float32)
                    + fclb_ref[...])
    # TODO(synk): training-mode dropout would need pltpu.prng_seed /
    # prng_random_bits masks inside the kernel; eval mode is identity.


# ------------------------------- wrapper ----------------------------------- #
def lstm_forward(x, packed_params):
    """x: (B, T, INPUT_DIM) float32. Returns fc_last output (B, OUTPUT_DIM)."""
    B = x.shape[0]
    out_dim = packed_params[-2].shape[1]   # fclw is (H4, out_dim)
    # Grid-less call: every operand is a full-array block resident in VMEM
    # for the single kernel invocation (no pipelining / double-buffering).
    return pl.pallas_call(
        _lstm_mlp_kernel,
        out_shape=jax.ShapeDtypeStruct((B, out_dim), jnp.float32),
    )(x, *packed_params)


# --------------------------- parameter handling ----------------------------- #
def init_params(key, input_dim, hdims, out_dim):
    """Deterministic init in PyTorch layout/conventions (weights (out, in),
    LSTM gate order [i, f, g, o], separate b_ih / b_hh)."""
    H1, H2, H3, H4 = hdims
    ks = list(jax.random.split(key, 16))
    orth = jax.nn.initializers.orthogonal()

    def xavier_normal(k, shape):          # (fan_out, fan_in)
        fan_out, fan_in = shape
        std = jnp.sqrt(2.0 / (fan_in + fan_out))
        return std * jax.random.normal(k, shape, jnp.float32)

    def kaiming_normal(k, shape):         # (fan_out, fan_in)
        _, fan_in = shape
        std = jnp.sqrt(2.0 / fan_in)
        return std * jax.random.normal(k, shape, jnp.float32)

    def unif(k, shape, fan):
        bound = 1.0 / jnp.sqrt(fan)
        return jax.random.uniform(k, shape, jnp.float32, -bound, bound)

    wih1 = xavier_normal(ks[0], (4 * H1, input_dim))
    whh1 = orth(ks[1], (4 * H1, H1), jnp.float32)
    bih1 = unif(ks[2], (4 * H1,), H1)
    bhh1 = unif(ks[3], (4 * H1,), H1)

    wih2 = xavier_normal(ks[4], (4 * H2, H1))
    whh2 = orth(ks[5], (4 * H2, H2), jnp.float32)
    bih2 = unif(ks[6], (4 * H2,), H2)
    bhh2 = unif(ks[7], (4 * H2,), H2)

    fc1w = kaiming_normal(ks[8], (H3, H2))
    fc1b = unif(ks[9], (H3,), H2)
    fc2w = kaiming_normal(ks[10], (H4, H3))
    fc2b = unif(ks[11], (H4,), H3)
    fclw = kaiming_normal(ks[12], (out_dim, H4))
    fclb = unif(ks[13], (out_dim,), H4)

    return (wih1, whh1, bih1, bhh1, wih2, whh2, bih2, bhh2,
            fc1w, fc1b, fc2w, fc2b, fclw, fclb)


def _reorder_ifgo_to_ifog(a):
    """Rows grouped [i, f, g, o] (PyTorch) -> [i, f, o, g]."""
    H = a.shape[0] // 4
    return jnp.concatenate([a[:2 * H], a[3 * H:], a[2 * H:3 * H]], axis=0)


def pack_params(p):
    """PyTorch-layout params -> kernel layout:
       * LSTM1: W_x1 (D, 4H), W_h1 (H, 4H) kept separate so the input
         projection can be precomputed for all timesteps in one matmul;
         bias = (b_ih + b_hh) as a (1, 4H) row.  Gates reordered to
         [i, f, o, g].
       * LSTM2: fused W2 = [W_ih2; W_hh2]^T of shape (H1+H2, 4H2), same gate
         reorder; bias (1, 4H2).
       * FC:    weights transposed to (in, out), biases as (1, out) rows."""
    (wih1, whh1, bih1, bhh1, wih2, whh2, bih2, bhh2,
     fc1w, fc1b, fc2w, fc2b, fclw, fclb) = p

    wx1 = _reorder_ifgo_to_ifog(wih1).T                       # (D, 4H1)
    wh1 = _reorder_ifgo_to_ifog(whh1).T                       # (H1, 4H1)
    b1 = _reorder_ifgo_to_ifog(bih1 + bhh1).reshape(1, -1)    # (1, 4H1)

    w2 = _reorder_ifgo_to_ifog(
        jnp.concatenate([wih2, whh2], axis=1)).T              # (H1+H2, 4H2)
    b2 = _reorder_ifgo_to_ifog(bih2 + bhh2).reshape(1, -1)    # (1, 4H2)

    return (wx1, wh1, b1, w2, b2,
            fc1w.T, fc1b.reshape(1, -1),
            fc2w.T, fc2b.reshape(1, -1),
            fclw.T, fclb.reshape(1, -1))


# ----------------------------- JAX reference ------------------------------- #
def reference_forward(x, params):
    """Pure-JAX reference using the PyTorch-layout params and gate order."""
    (wih1, whh1, bih1, bhh1, wih2, whh2, bih2, bhh2,
     fc1w, fc1b, fc2w, fc2b, fclw, fclb) = params
    B, T, _ = x.shape

    def run_lstm(seq, wih, whh, bih, bhh):
        H = whh.shape[1]
        h = jnp.zeros((B, H), jnp.float32)
        c = jnp.zeros((B, H), jnp.float32)
        outs = []
        for t in range(T):
            g = seq[:, t, :] @ wih.T + h @ whh.T + bih + bhh
            i = jax.nn.sigmoid(g[:, :H])
            f = jax.nn.sigmoid(g[:, H:2 * H])
            gg = jnp.tanh(g[:, 2 * H:3 * H])
            o = jax.nn.sigmoid(g[:, 3 * H:])
            c = f * c + i * gg
            h = o * jnp.tanh(c)
            outs.append(h)
        return jnp.stack(outs, axis=1)

    y = run_lstm(x, wih1, whh1, bih1, bhh1)
    y = run_lstm(y, wih2, whh2, bih2, bhh2)
    z = y[:, -1, :]
    z = jnp.maximum(z @ fc1w.T + fc1b, 0.0)
    z = jnp.maximum(z @ fc2w.T + fc2b, 0.0)
    return z @ fclw.T + fclb


# ---------------------------------- main ----------------------------------- #
if __name__ == "__main__":
    INPUT_DIM = 16
    HIDDEN_DIMS = [32, 32, 32, 32]   # unit_num1..4
    OUTPUT_DIM = 4
    B, T = 2, 8

    key = jax.random.PRNGKey(0)
    k_x, k_p = jax.random.split(key)
    x = jax.random.normal(k_x, (B, T, INPUT_DIM), jnp.float32)

    torch_params = init_params(k_p, INPUT_DIM, HIDDEN_DIMS, OUTPUT_DIM)
    packed = pack_params(torch_params)

    out = lstm_forward(x, packed)
    out = jax.block_until_ready(out)

    ref = reference_forward(x, torch_params)
    assert out.shape == (B, OUTPUT_DIM)
    assert jnp.allclose(out, ref, rtol=1e-5, atol=1e-5), (out, ref)

    print("KERNEL_OK")
</pallas_src>

<mosaic_0001>
module attributes {stable_mosaic.version = 11 : i64} {
  func.func @_lstm_mlp_kernel(%arg0: memref<2x8x16xf32, #tpu.memory_space<vmem>>, %arg1: memref<16x128xf32, #tpu.memory_space<vmem>>, %arg2: memref<32x128xf32, #tpu.memory_space<vmem>>, %arg3: memref<1x128xf32, #tpu.memory_space<vmem>>, %arg4: memref<64x128xf32, #tpu.memory_space<vmem>>, %arg5: memref<1x128xf32, #tpu.memory_space<vmem>>, %arg6: memref<32x32xf32, #tpu.memory_space<vmem>>, %arg7: memref<1x32xf32, #tpu.memory_space<vmem>>, %arg8: memref<32x32xf32, #tpu.memory_space<vmem>>, %arg9: memref<1x32xf32, #tpu.memory_space<vmem>>, %arg10: memref<32x4xf32, #tpu.memory_space<vmem>>, %arg11: memref<1x4xf32, #tpu.memory_space<vmem>>, %arg12: memref<2x4xf32, #tpu.memory_space<vmem>>) attributes {dimension_semantics = [], scalar_prefetch = 0 : i64, scratch_operands = 0 : i64, tpu.core_type = #tpu.core_type<tc>} {
    %c0 = arith.constant 0 : index
    %c0_0 = arith.constant 0 : index
    %c0_1 = arith.constant 0 : index
    %0 = vector.load %arg0[%c0, %c0_0, %c0_1] : memref<2x8x16xf32, #tpu.memory_space<vmem>>, vector<2x8x16xf32>
    %1 = vector.shape_cast %0 : vector<2x8x16xf32> to vector<16x16xf32>
    %c0_2 = arith.constant 0 : index
    %c0_3 = arith.constant 0 : index
    %2 = vector.load %arg1[%c0_2, %c0_3] : memref<16x128xf32, #tpu.memory_space<vmem>>, vector<16x128xf32>
    %cst = arith.constant dense<0.000000e+00> : vector<16x128xf32>
    %3 = tpu.matmul %1, %2, %cst {dimension_numbers = #tpu.dot_dimension_numbers<[1], [0], [0], [1], [0, 0, 1, 1], [], []>} : vector<16x16xf32>, vector<16x128xf32>, vector<16x128xf32> -> vector<16x128xf32>
    %c0_4 = arith.constant 0 : index
    %c0_5 = arith.constant 0 : index
    %4 = vector.load %arg3[%c0_4, %c0_5] : memref<1x128xf32, #tpu.memory_space<vmem>>, vector<1x128xf32>
    %5 = vector.broadcast %4 : vector<1x128xf32> to vector<16x128xf32>
    %6 = arith.addf %3, %5 : vector<16x128xf32>
    %7 = vector.shape_cast %6 : vector<16x128xf32> to vector<2x8x128xf32>
    %c0_6 = arith.constant 0 : index
    %c0_7 = arith.constant 0 : index
    %8 = vector.load %arg2[%c0_6, %c0_7] : memref<32x128xf32, #tpu.memory_space<vmem>>, vector<32x128xf32>
    %c0_8 = arith.constant 0 : index
    %c0_9 = arith.constant 0 : index
    %9 = vector.load %arg4[%c0_8, %c0_9] : memref<64x128xf32, #tpu.memory_space<vmem>>, vector<64x128xf32>
    %c0_10 = arith.constant 0 : index
    %c0_11 = arith.constant 0 : index
    %10 = vector.load %arg5[%c0_10, %c0_11] : memref<1x128xf32, #tpu.memory_space<vmem>>, vector<1x128xf32>
    %11 = vector.shape_cast %10 : vector<1x128xf32> to vector<1x128xf32>
    %12 = vector.broadcast %11 : vector<1x128xf32> to vector<2x128xf32>
    %cst_12 = arith.constant 0.000000e+00 : f32
    %13 = vector.broadcast %cst_12 : f32 to vector<2x32xf32>
    %cst_13 = arith.constant 0.000000e+00 : f32
    %14 = vector.broadcast %cst_13 : f32 to vector<2x32xf32>
    %cst_14 = arith.constant 0.000000e+00 : f32
    %15 = vector.broadcast %cst_14 : f32 to vector<2x32xf32>
    %cst_15 = arith.constant 0.000000e+00 : f32
    %16 = vector.broadcast %cst_15 : f32 to vector<2x32xf32>
    %17 = vector.extract_strided_slice %7 {offsets = [0, 0, 0], sizes = [2, 1, 128], strides = [1, 1, 1]} : vector<2x8x128xf32> to vector<2x1x128xf32>
    %18 = vector.shape_cast %17 : vector<2x1x128xf32> to vector<2x128xf32>
    %cst_16 = arith.constant dense<0.000000e+00> : vector<2x128xf32>
    %19 = tpu.matmul %13, %8, %cst_16 {dimension_numbers = #tpu.dot_dimension_numbers<[1], [0], [0], [1], [0, 0, 1, 1], [], []>} : vector<2x32xf32>, vector<32x128xf32>, vector<2x128xf32> -> vector<2x128xf32>
    %20 = arith.addf %18, %19 : vector<2x128xf32>
    %21 = arith.negf %20 : vector<2x128xf32>
    %22 = math.exp %21 : vector<2x128xf32>
    %cst_17 = arith.constant 1.000000e+00 : f32
    %23 = vector.broadcast %cst_17 : f32 to vector<2x128xf32>
    %24 = arith.addf %23, %22 : vector<2x128xf32>
    %25 = arith.divf %23, %24 : vector<2x128xf32>
    %26 = math.tanh %20 : vector<2x128xf32>
    %27 = vector.extract_strided_slice %25 {offsets = [0, 0], sizes = [2, 32], strides = [1, 1]} : vector<2x128xf32> to vector<2x32xf32>
    %28 = vector.extract_strided_slice %25 {offsets = [0, 32], sizes = [2, 32], strides = [1, 1]} : vector<2x128xf32> to vector<2x32xf32>
    %29 = vector.extract_strided_slice %25 {offsets = [0, 64], sizes = [2, 32], strides = [1, 1]} : vector<2x128xf32> to vector<2x32xf32>
    %30 = vector.extract_strided_slice %26 {offsets = [0, 96], sizes = [2, 32], strides = [1, 1]} : vector<2x128xf32> to vector<2x32xf32>
    %31 = arith.mulf %28, %14 : vector<2x32xf32>
    %32 = arith.mulf %27, %30 : vector<2x32xf32>
    %33 = arith.addf %31, %32 : vector<2x32xf32>
    %34 = math.tanh %33 : vector<2x32xf32>
    %35 = arith.mulf %29, %34 : vector<2x32xf32>
    %36 = tpu.concatenate %35, %15 in 1 : vector<2x32xf32>, vector<2x32xf32> -> vector<2x64xf32>
    %cst_18 = arith.constant dense<0.000000e+00> : vector<2x128xf32>
    %37 = tpu.matmul %36, %9, %cst_18 {dimension_numbers = #tpu.dot_dimension_numbers<[1], [0], [0], [1], [0, 0, 1, 1], [], []>} : vector<2x64xf32>, vector<64x128xf32>, vector<2x128xf32> -> vector<2x128xf32>
    %38 = arith.addf %37, %12 : vector<2x128xf32>
    %39 = arith.negf %38 : vector<2x128xf32>
    %40 = math.exp %39 : vector<2x128xf32>
    %cst_19 = arith.constant 1.000000e+00 : f32
    %41 = vector.broadcast %cst_19 : f32 to vector<2x128xf32>
    %42 = arith.addf %41, %40 : vector<2x128xf32>
    %43 = arith.divf %41, %42 : vector<2x128xf32>
    %44 = math.tanh %38 : vector<2x128xf32>
    %45 = vector.extract_strided_slice %43 {offsets = [0, 0], sizes = [2, 32], strides = [1, 1]} : vector<2x128xf32> to vector<2x32xf32>
    %46 = vector.extract_strided_slice %43 {offsets = [0, 32], sizes = [2, 32], strides = [1, 1]} : vector<2x128xf32> to vector<2x32xf32>
    %47 = vector.extract_strided_slice %43 {offsets = [0, 64], sizes = [2, 32], strides = [1, 1]} : vector<2x128xf32> to vector<2x32xf32>
    %48 = vector.extract_strided_slice %44 {offsets = [0, 96], sizes = [2, 32], strides = [1, 1]} : vector<2x128xf32> to vector<2x32xf32>
    %49 = arith.mulf %46, %16 : vector<2x32xf32>
    %50 = arith.mulf %45, %48 : vector<2x32xf32>
    %51 = arith.addf %49, %50 : vector<2x32xf32>
    %52 = math.tanh %51 : vector<2x32xf32>
    %53 = arith.mulf %47, %52 : vector<2x32xf32>
    %54 = vector.extract_strided_slice %7 {offsets = [0, 1, 0], sizes = [2, 1, 128], strides = [1, 1, 1]} : vector<2x8x128xf32> to vector<2x1x128xf32>
    %55 = vector.shape_cast %54 : vector<2x1x128xf32> to vector<2x128xf32>
    %cst_20 = arith.constant dense<0.000000e+00> : vector<2x128xf32>
    %56 = tpu.matmul %35, %8, %cst_20 {dimension_numbers = #tpu.dot_dimension_numbers<[1], [0], [0], [1], [0, 0, 1, 1], [], []>} : vector<2x32xf32>, vector<32x128xf32>, vector<2x128xf32> -> vector<2x128xf32>
    %57 = arith.addf %55, %56 : vector<2x128xf32>
    %58 = arith.negf %57 : vector<2x128xf32>
    %59 = math.exp %58 : vector<2x128xf32>
    %cst_21 = arith.constant 1.000000e+00 : f32
    %60 = vector.broadcast %cst_21 : f32 to vector<2x128xf32>
    %61 = arith.addf %60, %59 : vector<2x128xf32>
    %62 = arith.divf %60, %61 : vector<2x128xf32>
    %63 = math.tanh %57 : vector<2x128xf32>
    %64 = vector.extract_strided_slice %62 {offsets = [0, 0], sizes = [2, 32], strides = [1, 1]} : vector<2x128xf32> to vector<2x32xf32>
    %65 = vector.extract_strided_slice %62 {offsets = [0, 32], sizes = [2, 32], strides = [1, 1]} : vector<2x128xf32> to vector<2x32xf32>
    %66 = vector.extract_strided_slice %62 {offsets = [0, 64], sizes = [2, 32], strides = [1, 1]} : vector<2x128xf32> to vector<2x32xf32>
    %67 = vector.extract_strided_slice %63 {offsets = [0, 96], sizes = [2, 32], strides = [1, 1]} : vector<2x128xf32> to vector<2x32xf32>
    %68 = arith.mulf %65, %33 : vector<2x32xf32>
    %69 = arith.mulf %64, %67 : vector<2x32xf32>
    %70 = arith.addf %68, %69 : vector<2x32xf32>
    %71 = math.tanh %70 : vector<2x32xf32>
    %72 = arith.mulf %66, %71 : vector<2x32xf32>
    %73 = tpu.concatenate %72, %53 in 1 : vector<2x32xf32>, vector<2x32xf32> -> vector<2x64xf32>
    %cst_22 = arith.constant dense<0.000000e+00> : vector<2x128xf32>
    %74 = tpu.matmul %73, %9, %cst_22 {dimension_numbers = #tpu.dot_dimension_numbers<[1], [0], [0], [1], [0, 0, 1, 1], [], []>} : vector<2x64xf32>, vector<64x128xf32>, vector<2x128xf32> -> vector<2x128xf32>
    %75 = arith.addf %74, %12 : vector<2x128xf32>
    %76 = arith.negf %75 : vector<2x128xf32>
    %77 = math.exp %76 : vector<2x128xf32>
    %cst_23 = arith.constant 1.000000e+00 : f32
    %78 = vector.broadcast %cst_23 : f32 to vector<2x128xf32>
    %79 = arith.addf %78, %77 : vector<2x128xf32>
    %80 = arith.divf %78, %79 : vector<2x128xf32>
    %81 = math.tanh %75 : vector<2x128xf32>
    %82 = vector.extract_strided_slice %80 {offsets = [0, 0], sizes = [2, 32], strides = [1, 1]} : vector<2x128xf32> to vector<2x32xf32>
    %83 = vector.extract_strided_slice %80 {offsets = [0, 32], sizes = [2, 32], strides = [1, 1]} : vector<2x128xf32> to vector<2x32xf32>
    %84 = vector.extract_strided_slice %80 {offsets = [0, 64], sizes = [2, 32], strides = [1, 1]} : vector<2x128xf32> to vector<2x32xf32>
    %85 = vector.extract_strided_slice %81 {offsets = [0, 96], sizes = [2, 32], strides = [1, 1]} : vector<2x128xf32> to vector<2x32xf32>
    %86 = arith.mulf %83, %51 : vector<2x32xf32>
    %87 = arith.mulf %82, %85 : vector<2x32xf32>
    %88 = arith.addf %86, %87 : vector<2x32xf32>
    %89 = math.tanh %88 : vector<2x32xf32>
    %90 = arith.mulf %84, %89 : vector<2x32xf32>
    %91 = vector.extract_strided_slice %7 {offsets = [0, 2, 0], sizes = [2, 1, 128], strides = [1, 1, 1]} : vector<2x8x128xf32> to vector<2x1x128xf32>
    %92 = vector.shape_cast %91 : vector<2x1x128xf32> to vector<2x128xf32>
    %cst_24 = arith.constant dense<0.000000e+00> : vector<2x128xf32>
    %93 = tpu.matmul %72, %8, %cst_24 {dimension_numbers = #tpu.dot_dimension_numbers<[1], [0], [0], [1], [0, 0, 1, 1], [], []>} : vector<2x32xf32>, vector<32x128xf32>, vector<2x128xf32> -> vector<2x128xf32>
    %94 = arith.addf %92, %93 : vector<2x128xf32>
    %95 = arith.negf %94 : vector<2x128xf32>
    %96 = math.exp %95 : vector<2x128xf32>
    %cst_25 = arith.constant 1.000000e+00 : f32
    %97 = vector.broadcast %cst_25 : f32 to vector<2x128xf32>
    %98 = arith.addf %97, %96 : vector<2x128xf32>
    %99 = arith.divf %97, %98 : vector<2x128xf32>
    %100 = math.tanh %94 : vector<2x128xf32>
    %101 = vector.extract_strided_slice %99 {offsets = [0, 0], sizes = [2, 32], strides = [1, 1]} : vector<2x128xf32> to vector<2x32xf32>
    %102 = vector.extract_strided_slice %99 {offsets = [0, 32], sizes = [2, 32], strides = [1, 1]} : vector<2x128xf32> to vector<2x32xf32>
    %103 = vector.extract_strided_slice %99 {offsets = [0, 64], sizes = [2, 32], strides = [1, 1]} : vector<2x128xf32> to vector<2x32xf32>
    %104 = vector.extract_strided_slice %100 {offsets = [0, 96], sizes = [2, 32], strides = [1, 1]} : vector<2x128xf32> to vector<2x32xf32>
    %105 = arith.mulf %102, %70 : vector<2x32xf32>
    %106 = arith.mulf %101, %104 : vector<2x32xf32>
    %107 = arith.addf %105, %106 : vector<2x32xf32>
    %108 = math.tanh %107 : vector<2x32xf32>
    %109 = arith.mulf %103, %108 : vector<2x32xf32>
    %110 = tpu.concatenate %109, %90 in 1 : vector<2x32xf32>, vector<2x32xf32> -> vector<2x64xf32>
    %cst_26 = arith.constant dense<0.000000e+00> : vector<2x128xf32>
    %111 = tpu.matmul %110, %9, %cst_26 {dimension_numbers = #tpu.dot_dimension_numbers<[1], [0], [0], [1], [0, 0, 1, 1], [], []>} : vector<2x64xf32>, vector<64x128xf32>, vector<2x128xf32> -> vector<2x128xf32>
    %112 = arith.addf %111, %12 : vector<2x128xf32>
    %113 = arith.negf %112 : vector<2x128xf32>
    %114 = math.exp %113 : vector<2x128xf32>
    %cst_27 = arith.constant 1.000000e+00 : f32
    %115 = vector.broadcast %cst_27 : f32 to vector<2x128xf32>
    %116 = arith.addf %115, %114 : vector<2x128xf32>
    %117 = arith.divf %115, %116 : vector<2x128xf32>
    %118 = math.tanh %112 : vector<2x128xf32>
    %119 = vector.extract_strided_slice %117 {offsets = [0, 0], sizes = [2, 32], strides = [1, 1]} : vector<2x128xf32> to vector<2x32xf32>
    %120 = vector.extract_strided_slice %117 {offsets = [0, 32], sizes = [2, 32], strides = [1, 1]} : vector<2x128xf32> to vector<2x32xf32>
    %121 = vector.extract_strided_slice %117 {offsets = [0, 64], sizes = [2, 32], strides = [1, 1]} : vector<2x128xf32> to vector<2x32xf32>
    %122 = vector.extract_strided_slice %118 {offsets = [0, 96], sizes = [2, 32], strides = [1, 1]} : vector<2x128xf32> to vector<2x32xf32>
    %123 = arith.mulf %120, %88 : vector<2x32xf32>
    %124 = arith.mulf %119, %122 : vector<2x32xf32>
    %125 = arith.addf %123, %124 : vector<2x32xf32>
    %126 = math.tanh %125 : vector<2x32xf32>
    %127 = arith.mulf %121, %126 : vector<2x32xf32>
    %128 = vector.extract_strided_slice %7 {offsets = [0, 3, 0], sizes = [2, 1, 128], strides = [1, 1, 1]} : vector<2x8x128xf32> to vector<2x1x128xf32>
    %129 = vector.shape_cast %128 : vector<2x1x128xf32> to vector<2x128xf32>
    %cst_28 = arith.constant dense<0.000000e+00> : vector<2x128xf32>
    %130 = tpu.matmul %109, %8, %cst_28 {dimension_numbers = #tpu.dot_dimension_numbers<[1], [0], [0], [1], [0, 0, 1, 1], [], []>} : vector<2x32xf32>, vector<32x128xf32>, vector<2x128xf32> -> vector<2x128xf32>
    %131 = arith.addf %129, %130 : vector<2x128xf32>
    %132 = arith.negf %131 : vector<2x128xf32>
    %133 = math.exp %132 : vector<2x128xf32>
    %cst_29 = arith.constant 1.000000e+00 : f32
    %134 = vector.broadcast %cst_29 : f32 to vector<2x128xf32>
    %135 = arith.addf %134, %133 : vector<2x128xf32>
    %136 = arith.divf %134, %135 : vector<2x128xf32>
    %137 = math.tanh %131 : vector<2x128xf32>
    %138 = vector.extract_strided_slice %136 {offsets = [0, 0], sizes = [2, 32], strides = [1, 1]} : vector<2x128xf32> to vector<2x32xf32>
    %139 = vector.extract_strided_slice %136 {offsets = [0, 32], sizes = [2, 32], strides = [1, 1]} : vector<2x128xf32> to vector<2x32xf32>
    %140 = vector.extract_strided_slice %136 {offsets = [0, 64], sizes = [2, 32], strides = [1, 1]} : vector<2x128xf32> to vector<2x32xf32>
    %141 = vector.extract_strided_slice %137 {offsets = [0, 96], sizes = [2, 32], strides = [1, 1]} : vector<2x128xf32> to vector<2x32xf32>
    %142 = arith.mulf %139, %107 : vector<2x32xf32>
    %143 = arith.mulf %138, %141 : vector<2x32xf32>
    %144 = arith.addf %142, %143 : vector<2x32xf32>
    %145 = math.tanh %144 : vector<2x32xf32>
    %146 = arith.mulf %140, %145 : vector<2x32xf32>
    %147 = tpu.concatenate %146, %127 in 1 : vector<2x32xf32>, vector<2x32xf32> -> vector<2x64xf32>
    %cst_30 = arith.constant dense<0.000000e+00> : vector<2x128xf32>
    %148 = tpu.matmul %147, %9, %cst_30 {dimension_numbers = #tpu.dot_dimension_numbers<[1], [0], [0], [1], [0, 0, 1, 1], [], []>} : vector<2x64xf32>, vector<64x128xf32>, vector<2x128xf32> -> vector<2x128xf32>
    %149 = arith.addf %148, %12 : vector<2x128xf32>
    %150 = arith.negf %149 : vector<2x128xf32>
    %151 = math.exp %150 : vector<2x128xf32>
    %cst_31 = arith.constant 1.000000e+00 : f32
    %152 = vector.broadcast %cst_31 : f32 to vector<2x128xf32>
    %153 = arith.addf %152, %151 : vector<2x128xf32>
    %154 = arith.divf %152, %153 : vector<2x128xf32>
    %155 = math.tanh %149 : vector<2x128xf32>
    %156 = vector.extract_strided_slice %154 {offsets = [0, 0], sizes = [2, 32], strides = [1, 1]} : vector<2x128xf32> to vector<2x32xf32>
    %157 = vector.extract_strided_slice %154 {offsets = [0, 32], sizes = [2, 32], strides = [1, 1]} : vector<2x128xf32> to vector<2x32xf32>
    %158 = vector.extract_strided_slice %154 {offsets = [0, 64], sizes = [2, 32], strides = [1, 1]} : vector<2x128xf32> to vector<2x32xf32>
    %159 = vector.extract_strided_slice %155 {offsets = [0, 96], sizes = [2, 32], strides = [1, 1]} : vector<2x128xf32> to vector<2x32xf32>
    %160 = arith.mulf %157, %125 : vector<2x32xf32>
    %161 = arith.mulf %156, %159 : vector<2x32xf32>
    %162 = arith.addf %160, %161 : vector<2x32xf32>
    %163 = math.tanh %162 : vector<2x32xf32>
    %164 = arith.mulf %158, %163 : vector<2x32xf32>
    %165 = vector.extract_strided_slice %7 {offsets = [0, 4, 0], sizes = [2, 1, 128], strides = [1, 1, 1]} : vector<2x8x128xf32> to vector<2x1x128xf32>
    %166 = vector.shape_cast %165 : vector<2x1x128xf32> to vector<2x128xf32>
    %cst_32 = arith.constant dense<0.000000e+00> : vector<2x128xf32>
    %167 = tpu.matmul %146, %8, %cst_32 {dimension_numbers = #tpu.dot_dimension_numbers<[1], [0], [0], [1], [0, 0, 1, 1], [], []>} : vector<2x32xf32>, vector<32x128xf32>, vector<2x128xf32> -> vector<2x128xf32>
    %168 = arith.addf %166, %167 : vector<2x128xf32>
    %169 = arith.negf %168 : vector<2x128xf32>
    %170 = math.exp %169 : vector<2x128xf32>
    %cst_33 = arith.constant 1.000000e+00 : f32
    %171 = vector.broadcast %cst_33 : f32 to vector<2x128xf32>
    %172 = arith.addf %171, %170 : vector<2x128xf32>
    %173 = arith.divf %171, %172 : vector<2x128xf32>
    %174 = math.tanh %168 : vector<2x128xf32>
    %175 = vector.extract_strided_slice %173 {offsets = [0, 0], sizes = [2, 32], strides = [1, 1]} : vector<2x128xf32> to vector<2x32xf32>
    %176 = vector.extract_strided_slice %173 {offsets = [0, 32], sizes = [2, 32], strides = [1, 1]} : vector<2x128xf32> to vector<2x32xf32>
    %177 = vector.extract_strided_slice %173 {offsets = [0, 64], sizes = [2, 32], strides = [1, 1]} : vector<2x128xf32> to vector<2x32xf32>
    %178 = vector.extract_strided_slice %174 {offsets = [0, 96], sizes = [2, 32], strides = [1, 1]} : vector<2x128xf32> to vector<2x32xf32>
    %179 = arith.mulf %176, %144 : vector<2x32xf32>
    %180 = arith.mulf %175, %178 : vector<2x32xf32>
    %181 = arith.addf %179, %180 : vector<2x32xf32>
    %182 = math.tanh %181 : vector<2x32xf32>
    %183 = arith.mulf %177, %182 : vector<2x32xf32>
    %184 = tpu.concatenate %183, %164 in 1 : vector<2x32xf32>, vector<2x32xf32> -> vector<2x64xf32>
    %cst_34 = arith.constant dense<0.000000e+00> : vector<2x128xf32>
    %185 = tpu.matmul %184, %9, %cst_34 {dimension_numbers = #tpu.dot_dimension_numbers<[1], [0], [0], [1], [0, 0, 1, 1], [], []>} : vector<2x64xf32>, vector<64x128xf32>, vector<2x128xf32> -> vector<2x128xf32>
    %186 = arith.addf %185, %12 : vector<2x128xf32>
    %187 = arith.negf %186 : vector<2x128xf32>
    %188 = math.exp %187 : vector<2x128xf32>
    %cst_35 = arith.constant 1.000000e+00 : f32
    %189 = vector.broadcast %cst_35 : f32 to vector<2x128xf32>
    %190 = arith.addf %189, %188 : vector<2x128xf32>
    %191 = arith.divf %189, %190 : vector<2x128xf32>
    %192 = math.tanh %186 : vector<2x128xf32>
    %193 = vector.extract_strided_slice %191 {offsets = [0, 0], sizes = [2, 32], strides = [1, 1]} : vector<2x128xf32> to vector<2x32xf32>
    %194 = vector.extract_strided_slice %191 {offsets = [0, 32], sizes = [2, 32], strides = [1, 1]} : vector<2x128xf32> to vector<2x32xf32>
    %195 = vector.extract_strided_slice %191 {offsets = [0, 64], sizes = [2, 32], strides = [1, 1]} : vector<2x128xf32> to vector<2x32xf32>
    %196 = vector.extract_strided_slice %192 {offsets = [0, 96], sizes = [2, 32], strides = [1, 1]} : vector<2x128xf32> to vector<2x32xf32>
    %197 = arith.mulf %194, %162 : vector<2x32xf32>
    %198 = arith.mulf %193, %196 : vector<2x32xf32>
    %199 = arith.addf %197, %198 : vector<2x32xf32>
    %200 = math.tanh %199 : vector<2x32xf32>
    %201 = arith.mulf %195, %200 : vector<2x32xf32>
    %202 = vector.extract_strided_slice %7 {offsets = [0, 5, 0], sizes = [2, 1, 128], strides = [1, 1, 1]} : vector<2x8x128xf32> to vector<2x1x128xf32>
    %203 = vector.shape_cast %202 : vector<2x1x128xf32> to vector<2x128xf32>
    %cst_36 = arith.constant dense<0.000000e+00> : vector<2x128xf32>
    %204 = tpu.matmul %183, %8, %cst_36 {dimension_numbers = #tpu.dot_dimension_numbers<[1], [0], [0], [1], [0, 0, 1, 1], [], []>} : vector<2x32xf32>, vector<32x128xf32>, vector<2x128xf32> -> vector<2x128xf32>
    %205 = arith.addf %203, %204 : vector<2x128xf32>
    %206 = arith.negf %205 : vector<2x128xf32>
    %207 = math.exp %206 : vector<2x128xf32>
    %cst_37 = arith.constant 1.000000e+00 : f32
    %208 = vector.broadcast %cst_37 : f32 to vector<2x128xf32>
    %209 = arith.addf %208, %207 : vector<2x128xf32>
    %210 = arith.divf %208, %209 : vector<2x128xf32>
    %211 = math.tanh %205 : vector<2x128xf32>
    %212 = vector.extract_strided_slice %210 {offsets = [0, 0], sizes = [2, 32], strides = [1, 1]} : vector<2x128xf32> to vector<2x32xf32>
    %213 = vector.extract_strided_slice %210 {offsets = [0, 32], sizes = [2, 32], strides = [1, 1]} : vector<2x128xf32> to vector<2x32xf32>
    %214 = vector.extract_strided_slice %210 {offsets = [0, 64], sizes = [2, 32], strides = [1, 1]} : vector<2x128xf32> to vector<2x32xf32>
    %215 = vector.extract_strided_slice %211 {offsets = [0, 96], sizes = [2, 32], strides = [1, 1]} : vector<2x128xf32> to vector<2x32xf32>
    %216 = arith.mulf %213, %181 : vector<2x32xf32>
    %217 = arith.mulf %212, %215 : vector<2x32xf32>
    %218 = arith.addf %216, %217 : vector<2x32xf32>
    %219 = math.tanh %218 : vector<2x32xf32>
    %220 = arith.mulf %214, %219 : vector<2x32xf32>
    %221 = tpu.concatenate %220, %201 in 1 : vector<2x32xf32>, vector<2x32xf32> -> vector<2x64xf32>
    %cst_38 = arith.constant dense<0.000000e+00> : vector<2x128xf32>
    %222 = tpu.matmul %221, %9, %cst_38 {dimension_numbers = #tpu.dot_dimension_numbers<[1], [0], [0], [1], [0, 0, 1, 1], [], []>} : vector<2x64xf32>, vector<64x128xf32>, vector<2x128xf32> -> vector<2x128xf32>
    %223 = arith.addf %222, %12 : vector<2x128xf32>
    %224 = arith.negf %223 : vector<2x128xf32>
    %225 = math.exp %224 : vector<2x128xf32>
    %cst_39 = arith.constant 1.000000e+00 : f32
    %226 = vector.broadcast %cst_39 : f32 to vector<2x128xf32>
    %227 = arith.addf %226, %225 : vector<2x128xf32>
    %228 = arith.divf %226, %227 : vector<2x128xf32>
    %229 = math.tanh %223 : vector<2x128xf32>
    %230 = vector.extract_strided_slice %228 {offsets = [0, 0], sizes = [2, 32], strides = [1, 1]} : vector<2x128xf32> to vector<2x32xf32>
    %231 = vector.extract_strided_slice %228 {offsets = [0, 32], sizes = [2, 32], strides = [1, 1]} : vector<2x128xf32> to vector<2x32xf32>
    %232 = vector.extract_strided_slice %228 {offsets = [0, 64], sizes = [2, 32], strides = [1, 1]} : vector<2x128xf32> to vector<2x32xf32>
    %233 = vector.extract_strided_slice %229 {offsets = [0, 96], sizes = [2, 32], strides = [1, 1]} : vector<2x128xf32> to vector<2x32xf32>
    %234 = arith.mulf %231, %199 : vector<2x32xf32>
    %235 = arith.mulf %230, %233 : vector<2x32xf32>
    %236 = arith.addf %234, %235 : vector<2x32xf32>
    %237 = math.tanh %236 : vector<2x32xf32>
    %238 = arith.mulf %232, %237 : vector<2x32xf32>
    %239 = vector.extract_strided_slice %7 {offsets = [0, 6, 0], sizes = [2, 1, 128], strides = [1, 1, 1]} : vector<2x8x128xf32> to vector<2x1x128xf32>
    %240 = vector.shape_cast %239 : vector<2x1x128xf32> to vector<2x128xf32>
    %cst_40 = arith.constant dense<0.000000e+00> : vector<2x128xf32>
    %241 = tpu.matmul %220, %8, %cst_40 {dimension_numbers = #tpu.dot_dimension_numbers<[1], [0], [0], [1], [0, 0, 1, 1], [], []>} : vector<2x32xf32>, vector<32x128xf32>, vector<2x128xf32> -> vector<2x128xf32>
    %242 = arith.addf %240, %241 : vector<2x128xf32>
    %243 = arith.negf %242 : vector<2x128xf32>
    %244 = math.exp %243 : vector<2x128xf32>
    %cst_41 = arith.constant 1.000000e+00 : f32
    %245 = vector.broadcast %cst_41 : f32 to vector<2x128xf32>
    %246 = arith.addf %245, %244 : vector<2x128xf32>
    %247 = arith.divf %245, %246 : vector<2x128xf32>
    %248 = math.tanh %242 : vector<2x128xf32>
    %249 = vector.extract_strided_slice %247 {offsets = [0, 0], sizes = [2, 32], strides = [1, 1]} : vector<2x128xf32> to vector<2x32xf32>
    %250 = vector.extract_strided_slice %247 {offsets = [0, 32], sizes = [2, 32], strides = [1, 1]} : vector<2x128xf32> to vector<2x32xf32>
    %251 = vector.extract_strided_slice %247 {offsets = [0, 64], sizes = [2, 32], strides = [1, 1]} : vector<2x128xf32> to vector<2x32xf32>
    %252 = vector.extract_strided_slice %248 {offsets = [0, 96], sizes = [2, 32], strides = [1, 1]} : vector<2x128xf32> to vector<2x32xf32>
    %253 = arith.mulf %250, %218 : vector<2x32xf32>
    %254 = arith.mulf %249, %252 : vector<2x32xf32>
    %255 = arith.addf %253, %254 : vector<2x32xf32>
    %256 = math.tanh %255 : vector<2x32xf32>
    %257 = arith.mulf %251, %256 : vector<2x32xf32>
    %258 = tpu.concatenate %257, %238 in 1 : vector<2x32xf32>, vector<2x32xf32> -> vector<2x64xf32>
    %cst_42 = arith.constant dense<0.000000e+00> : vector<2x128xf32>
    %259 = tpu.matmul %258, %9, %cst_42 {dimension_numbers = #tpu.dot_dimension_numbers<[1], [0], [0], [1], [0, 0, 1, 1], [], []>} : vector<2x64xf32>, vector<64x128xf32>, vector<2x128xf32> -> vector<2x128xf32>
    %260 = arith.addf %259, %12 : vector<2x128xf32>
    %261 = arith.negf %260 : vector<2x128xf32>
    %262 = math.exp %261 : vector<2x128xf32>
    %cst_43 = arith.constant 1.000000e+00 : f32
    %263 = vector.broadcast %cst_43 : f32 to vector<2x128xf32>
    %264 = arith.addf %263, %262 : vector<2x128xf32>
    %265 = arith.divf %263, %264 : vector<2x128xf32>
    %266 = math.tanh %260 : vector<2x128xf32>
    %267 = vector.extract_strided_slice %265 {offsets = [0, 0], sizes = [2, 32], strides = [1, 1]} : vector<2x128xf32> to vector<2x32xf32>
    %268 = vector.extract_strided_slice %265 {offsets = [0, 32], sizes = [2, 32], strides = [1, 1]} : vector<2x128xf32> to vector<2x32xf32>
    %269 = vector.extract_strided_slice %265 {offsets = [0, 64], sizes = [2, 32], strides = [1, 1]} : vector<2x128xf32> to vector<2x32xf32>
    %270 = vector.extract_strided_slice %266 {offsets = [0, 96], sizes = [2, 32], strides = [1, 1]} : vector<2x128xf32> to vector<2x32xf32>
    %271 = arith.mulf %268, %236 : vector<2x32xf32>
    %272 = arith.mulf %267, %270 : vector<2x32xf32>
    %273 = arith.addf %271, %272 : vector<2x32xf32>
    %274 = math.tanh %273 : vector<2x32xf32>
    %275 = arith.mulf %269, %274 : vector<2x32xf32>
    %276 = vector.extract_strided_slice %7 {offsets = [0, 7, 0], sizes = [2, 1, 128], strides = [1, 1, 1]} : vector<2x8x128xf32> to vector<2x1x128xf32>
    %277 = vector.shape_cast %276 : vector<2x1x128xf32> to vector<2x128xf32>
    %cst_44 = arith.constant dense<0.000000e+00> : vector<2x128xf32>
    %278 = tpu.matmul %257, %8, %cst_44 {dimension_numbers = #tpu.dot_dimension_numbers<[1], [0], [0], [1], [0, 0, 1, 1], [], []>} : vector<2x32xf32>, vector<32x128xf32>, vector<2x128xf32> -> vector<2x128xf32>
    %279 = arith.addf %277, %278 : vector<2x128xf32>
    %280 = arith.negf %279 : vector<2x128xf32>
    %281 = math.exp %280 : vector<2x128xf32>
    %cst_45 = arith.constant 1.000000e+00 : f32
    %282 = vector.broadcast %cst_45 : f32 to vector<2x128xf32>
    %283 = arith.addf %282, %281 : vector<2x128xf32>
    %284 = arith.divf %282, %283 : vector<2x128xf32>
    %285 = math.tanh %279 : vector<2x128xf32>
    %286 = vector.extract_strided_slice %284 {offsets = [0, 0], sizes = [2, 32], strides = [1, 1]} : vector<2x128xf32> to vector<2x32xf32>
    %287 = vector.extract_strided_slice %284 {offsets = [0, 32], sizes = [2, 32], strides = [1, 1]} : vector<2x128xf32> to vector<2x32xf32>
    %288 = vector.extract_strided_slice %284 {offsets = [0, 64], sizes = [2, 32], strides = [1, 1]} : vector<2x128xf32> to vector<2x32xf32>
    %289 = vector.extract_strided_slice %285 {offsets = [0, 96], sizes = [2, 32], strides = [1, 1]} : vector<2x128xf32> to vector<2x32xf32>
    %290 = arith.mulf %287, %255 : vector<2x32xf32>
    %291 = arith.mulf %286, %289 : vector<2x32xf32>
    %292 = arith.addf %290, %291 : vector<2x32xf32>
    %293 = math.tanh %292 : vector<2x32xf32>
    %294 = arith.mulf %288, %293 : vector<2x32xf32>
    %295 = tpu.concatenate %294, %275 in 1 : vector<2x32xf32>, vector<2x32xf32> -> vector<2x64xf32>
    %cst_46 = arith.constant dense<0.000000e+00> : vector<2x128xf32>
    %296 = tpu.matmul %295, %9, %cst_46 {dimension_numbers = #tpu.dot_dimension_numbers<[1], [0], [0], [1], [0, 0, 1, 1], [], []>} : vector<2x64xf32>, vector<64x128xf32>, vector<2x128xf32> -> vector<2x128xf32>
    %297 = arith.addf %296, %12 : vector<2x128xf32>
    %298 = arith.negf %297 : vector<2x128xf32>
    %299 = math.exp %298 : vector<2x128xf32>
    %cst_47 = arith.constant 1.000000e+00 : f32
    %300 = vector.broadcast %cst_47 : f32 to vector<2x128xf32>
    %301 = arith.addf %300, %299 : vector<2x128xf32>
    %302 = arith.divf %300, %301 : vector<2x128xf32>
    %303 = math.tanh %297 : vector<2x128xf32>
    %304 = vector.extract_strided_slice %302 {offsets = [0, 0], sizes = [2, 32], strides = [1, 1]} : vector<2x128xf32> to vector<2x32xf32>
    %305 = vector.extract_strided_slice %302 {offsets = [0, 32], sizes = [2, 32], strides = [1, 1]} : vector<2x128xf32> to vector<2x32xf32>
    %306 = vector.extract_strided_slice %302 {offsets = [0, 64], sizes = [2, 32], strides = [1, 1]} : vector<2x128xf32> to vector<2x32xf32>
    %307 = vector.extract_strided_slice %303 {offsets = [0, 96], sizes = [2, 32], strides = [1, 1]} : vector<2x128xf32> to vector<2x32xf32>
    %308 = arith.mulf %305, %273 : vector<2x32xf32>
    %309 = arith.mulf %304, %307 : vector<2x32xf32>
    %310 = arith.addf %308, %309 : vector<2x32xf32>
    %311 = math.tanh %310 : vector<2x32xf32>
    %312 = arith.mulf %306, %311 : vector<2x32xf32>
    %c0_48 = arith.constant 0 : index
    %c0_49 = arith.constant 0 : index
    %313 = vector.load %arg6[%c0_48, %c0_49] : memref<32x32xf32, #tpu.memory_space<vmem>>, vector<32x32xf32>
    %cst_50 = arith.constant dense<0.000000e+00> : vector<2x32xf32>
    %314 = tpu.matmul %312, %313, %cst_50 {dimension_numbers = #tpu.dot_dimension_numbers<[1], [0], [0], [1], [0, 0, 1, 1], [], []>} : vector<2x32xf32>, vector<32x32xf32>, vector<2x32xf32> -> vector<2x32xf32>
    %c0_51 = arith.constant 0 : index
    %c0_52 = arith.constant 0 : index
    %315 = vector.load %arg7[%c0_51, %c0_52] : memref<1x32xf32, #tpu.memory_space<vmem>>, vector<1x32xf32>
    %316 = vector.broadcast %315 : vector<1x32xf32> to vector<2x32xf32>
    %317 = arith.addf %314, %316 : vector<2x32xf32>
    %cst_53 = arith.constant 0.000000e+00 : f32
    %318 = vector.broadcast %cst_53 : f32 to vector<2x32xf32>
    %319 = arith.maximumf %317, %318 : vector<2x32xf32>
    %c0_54 = arith.constant 0 : index
    %c0_55 = arith.constant 0 : index
    %320 = vector.load %arg8[%c0_54, %c0_55] : memref<32x32xf32, #tpu.memory_space<vmem>>, vector<32x32xf32>
    %cst_56 = arith.constant dense<0.000000e+00> : vector<2x32xf32>
    %321 = tpu.matmul %319, %320, %cst_56 {dimension_numbers = #tpu.dot_dimension_numbers<[1], [0], [0], [1], [0, 0, 1, 1], [], []>} : vector<2x32xf32>, vector<32x32xf32>, vector<2x32xf32> -> vector<2x32xf32>
    %c0_57 = arith.constant 0 : index
    %c0_58 = arith.constant 0 : index
    %322 = vector.load %arg9[%c0_57, %c0_58] : memref<1x32xf32, #tpu.memory_space<vmem>>, vector<1x32xf32>
    %323 = vector.broadcast %322 : vector<1x32xf32> to vector<2x32xf32>
    %324 = arith.addf %321, %323 : vector<2x32xf32>
    %cst_59 = arith.constant 0.000000e+00 : f32
    %325 = vector.broadcast %cst_59 : f32 to vector<2x32xf32>
    %326 = arith.maximumf %324, %325 : vector<2x32xf32>
    %c0_60 = arith.constant 0 : index
    %c0_61 = arith.constant 0 : index
    %327 = vector.load %arg10[%c0_60, %c0_61] : memref<32x4xf32, #tpu.memory_space<vmem>>, vector<32x4xf32>
    %cst_62 = arith.constant dense<0.000000e+00> : vector<2x4xf32>
    %328 = tpu.matmul %326, %327, %cst_62 {dimension_numbers = #tpu.dot_dimension_numbers<[1], [0], [0], [1], [0, 0, 1, 1], [], []>} : vector<2x32xf32>, vector<32x4xf32>, vector<2x4xf32> -> vector<2x4xf32>
    %c0_63 = arith.constant 0 : index
    %c0_64 = arith.constant 0 : index
    %329 = vector.load %arg11[%c0_63, %c0_64] : memref<1x4xf32, #tpu.memory_space<vmem>>, vector<1x4xf32>
    %330 = vector.broadcast %329 : vector<1x4xf32> to vector<2x4xf32>
    %331 = arith.addf %328, %330 : vector<2x4xf32>
    %c0_65 = arith.constant 0 : index
    %c0_66 = arith.constant 0 : index
    %332 = vector.load %arg12[%c0_65, %c0_66] : memref<2x4xf32, #tpu.memory_space<vmem>>, vector<2x4xf32>
    tpu.vector_store %arg12[%c0_65, %c0_66], %331 {strides = array<i32>} : memref<2x4xf32, #tpu.memory_space<vmem>>, vector<2x4xf32>,
    return
  }
}

</mosaic_0001>

<llo_original>
// kernel: tpu_custom_call.1
$region0: #{tpu_custom_call.1}
  #allocation0 [shape = 'u32[]', space=smem, size = 0x4, offset = 0x4, fixed_abs, tag = 'smem constant byte address 0x4 - core index']
  #allocation1 [shape = 'u32[144,128]{1,0:T(1,128)}', space=vmem, size = 0x12000, scoped, tag = 'internal scratch']
  %s0 = inlined_call_operand.hbm [shape: f32[2,8,16], index: 0, kind: input, shape index: {}]
  %s1 = inlined_call_operand.hbm [shape: f32[16,128], index: 1, kind: input, shape index: {}]
  %s2 = inlined_call_operand.vmem [shape: f32[32,128], index: 2, kind: input, shape index: {}]
  %s3 = inlined_call_operand.vmem [shape: f32[1,128], index: 3, kind: input, shape index: {}]
  %s4 = inlined_call_operand.hbm [shape: f32[64,128], index: 4, kind: input, shape index: {}]
  %s5 = inlined_call_operand.vmem [shape: f32[1,128], index: 5, kind: input, shape index: {}]
  %s6 = inlined_call_operand.hbm [shape: f32[32,32], index: 6, kind: input, shape index: {}]
  %s7 = inlined_call_operand.vmem [shape: f32[1,32], index: 7, kind: input, shape index: {}]
  %s8 = inlined_call_operand.hbm [shape: f32[32,32], index: 8, kind: input, shape index: {}]
  %s9 = inlined_call_operand.vmem [shape: f32[1,32], index: 9, kind: input, shape index: {}]
  %s10 = inlined_call_operand.vmem [shape: f32[32,4], index: 10, kind: input, shape index: {}]
  %s11 = inlined_call_operand.vmem [shape: f32[1,4], index: 11, kind: input, shape index: {}]
  %s12 = inlined_call_operand.hbm [shape: f32[2,4], index: 12, kind: output, shape index: {}]
  %s13 = sld [smem:[#allocation0]]
  $region78: #{tpu_custom_call.1} parent=0
    _
  %s15 = ssub.s32 1, %s13
  %s16 = scalar_select 0, %s15, %s13
  $region1: #{tpu_custom_call.1} parent=0
    #allocation2 [shape = 'u8[8192]{0}', space=vmem, size = 0x2000, scoped, tag = 'input window, operand 0, single buffered']
    #allocation3 [shape = 's32[1]{0}', space=sflag, size = 0x4, scoped, tag = 'scoped memory for tpu_custom_call.1']
    #allocation4 [shape = 's32[1]{0}', space=sflag, size = 0x4, scoped, tag = 'scoped memory for tpu_custom_call.1']
    #allocation5 [shape = 'u8[8192]{0}', space=vmem, size = 0x2000, scoped, tag = 'input window, operand 1, single buffered']
    #allocation6 [shape = 's32[1]{0}', space=sflag, size = 0x4, scoped, tag = 'scoped memory for tpu_custom_call.1']
    #allocation7 [shape = 'u8[32768]{0}', space=vmem, size = 0x8000, scoped, tag = 'input window, operand 4, single buffered']
    #allocation8 [shape = 'u8[16384]{0}', space=vmem, size = 0x4000, scoped, tag = 'input window, operand 6, single buffered']
    #allocation9 [shape = 's32[1]{0}', space=sflag, size = 0x4, scoped, tag = 'scoped memory for tpu_custom_call.1']
    #allocation10 [shape = 'u8[16384]{0}', space=vmem, size = 0x4000, scoped, tag = 'input window, operand 8, single buffered']
    #allocation11 [shape = 'u8[1024]{0}', space=vmem, size = 0x400, scoped, tag = 'output window, operand 0, single buffered']
    %17 = vsyncpa [#allocation3], 0
    %18 = vsyncpa [#allocation6], 0
    %19 = vsyncpa [#allocation9], 0
    %20 = vsyncpa [#allocation4], 0
    // Predicated region
    $region2: #{tpu_custom_call.1} parent=1 // pred_check
      _
    $region3: #{tpu_custom_call.1} parent=1 // pred_check_branch
      %22 = sbr.rel (0) target = $region5
    $region4: #{tpu_custom_call.1} parent=1 // pred_region
      %s24 = ssub.s32 256, 256
      %25 = vsyncadd [#allocation3], %s24
      %s26 = sshll.u32 [#allocation2], 4
      %s27 = int_to_ptr.vmem [resolvable:$true] %s26
      %32 = dma.hbm_to_vmem [thread:$0]  %s0, 256, %s27, [#allocation3], 128, 128, 8
    $region5: #{tpu_custom_call.1} parent=1 // pred_fallthru
      _
    // Predicated region
    $region6: #{tpu_custom_call.1} parent=1 // pred_check
      _
    $region7: #{tpu_custom_call.1} parent=1 // pred_check_branch
      %34 = sbr.rel (0) target = $region9
    $region8: #{tpu_custom_call.1} parent=1 // pred_region
      %s36 = ssub.s32 256, 256
      %37 = vsyncadd [#allocation6], %s36
      %s38 = sshll.u32 [#allocation5], 4
      %s39 = int_to_ptr.vmem [resolvable:$true] %s38
      %44 = dma.hbm_to_vmem [thread:$0]  %s1, 256, %s39, [#allocation6], 128, 128, 8
    $region9: #{tpu_custom_call.1} parent=1 // pred_fallthru
      _
    // Predicated region
    $region10: #{tpu_custom_call.1} parent=1 // pred_check
      _
    $region11: #{tpu_custom_call.1} parent=1 // pred_check_branch
      %46 = sbr.rel (0) target = $region13
    $region12: #{tpu_custom_call.1} parent=1 // pred_region
      _
    $region13: #{tpu_custom_call.1} parent=1 // pred_fallthru
      _
    // Predicated region
    $region14: #{tpu_custom_call.1} parent=1 // pred_check
      _
    $region15: #{tpu_custom_call.1} parent=1 // pred_check_branch
      %48 = sbr.rel (0) target = $region17
    $region16: #{tpu_custom_call.1} parent=1 // pred_region
      _
    $region17: #{tpu_custom_call.1} parent=1 // pred_fallthru
      _
    // Predicated region
    $region18: #{tpu_custom_call.1} parent=1 // pred_check
      _
    $region19: #{tpu_custom_call.1} parent=1 // pred_check_branch
      %50 = sbr.rel (0) target = $region21
    $region20: #{tpu_custom_call.1} parent=1 // pred_region
      %s52 = ssub.s32 1024, 1024
      %53 = vsyncadd [#allocation6], %s52
      %s54 = sshll.u32 [#allocation7], 4
      %s55 = int_to_ptr.vmem [resolvable:$true] %s54
      %60 = dma.hbm_to_vmem [thread:$0]  %s4, 1024, %s55, [#allocation6], 128, 128, 8
    $region21: #{tpu_custom_call.1} parent=1 // pred_fallthru
      _
    // Predicated region
    $region22: #{tpu_custom_call.1} parent=1 // pred_check
      _
    $region23: #{tpu_custom_call.1} parent=1 // pred_check_branch
      %62 = sbr.rel (0) target = $region25
    $region24: #{tpu_custom_call.1} parent=1 // pred_region
      _
    $region25: #{tpu_custom_call.1} parent=1 // pred_fallthru
      _
    // Predicated region
    $region26: #{tpu_custom_call.1} parent=1 // pred_check
      _
    $region27: #{tpu_custom_call.1} parent=1 // pred_check_branch
      %64 = sbr.rel (0) target = $region29
    $region28: #{tpu_custom_call.1} parent=1 // pred_region
      %s66 = ssub.s32 512, 512
      %67 = vsyncadd [#allocation9], %s66
      %s68 = sshll.u32 [#allocation8], 4
      %s69 = int_to_ptr.vmem [resolvable:$true] %s68
      %74 = dma.hbm_to_vmem [thread:$0]  %s6, 512, %s69, [#allocation9], 128, 128, 8
    $region29: #{tpu_custom_call.1} parent=1 // pred_fallthru
      _
    // Predicated region
    $region30: #{tpu_custom_call.1} parent=1 // pred_check
      _
    $region31: #{tpu_custom_call.1} parent=1 // pred_check_branch
      %76 = sbr.rel (0) target = $region33
    $region32: #{tpu_custom_call.1} parent=1 // pred_region
      _
    $region33: #{tpu_custom_call.1} parent=1 // pred_fallthru
      _
    // Predicated region
    $region34: #{tpu_custom_call.1} parent=1 // pred_check
      _
    $region35: #{tpu_custom_call.1} parent=1 // pred_check_branch
      %78 = sbr.rel (0) target = $region37
    $region36: #{tpu_custom_call.1} parent=1 // pred_region
      %s80 = ssub.s32 512, 512
      %81 = vsyncadd [#allocation9], %s80
      %s82 = sshll.u32 [#allocation10], 4
      %s83 = int_to_ptr.vmem [resolvable:$true] %s82
      %88 = dma.hbm_to_vmem [thread:$0]  %s8, 512, %s83, [#allocation9], 128, 128, 8
    $region37: #{tpu_custom_call.1} parent=1 // pred_fallthru
      _
    // Predicated region
    $region38: #{tpu_custom_call.1} parent=1 // pred_check
      _
    $region39: #{tpu_custom_call.1} parent=1 // pred_check_branch
      %90 = sbr.rel (0) target = $region41
    $region40: #{tpu_custom_call.1} parent=1 // pred_region
      _
    $region41: #{tpu_custom_call.1} parent=1 // pred_fallthru
      _
    // Predicated region
    $region42: #{tpu_custom_call.1} parent=1 // pred_check
      _
    $region43: #{tpu_custom_call.1} parent=1 // pred_check_branch
      %92 = sbr.rel (0) target = $region45
    $region44: #{tpu_custom_call.1} parent=1 // pred_region
      _
    $region45: #{tpu_custom_call.1} parent=1 // pred_fallthru
      _
    // Predicated region
    $region46: #{tpu_custom_call.1} parent=1 // pred_check
      _
    $region47: #{tpu_custom_call.1} parent=1 // pred_check_branch
      %94 = sbr.rel (0) target = $region49
    $region48: #{tpu_custom_call.1} parent=1 // pred_region
      _
    $region49: #{tpu_custom_call.1} parent=1 // pred_fallthru
      _
    // Predicated region
    $region50: #{tpu_custom_call.1} parent=1 // pred_check
      _
    $region51: #{tpu_custom_call.1} parent=1 // pred_check_branch
      %96 = sbr.rel (0) target = $region53
    $region52: #{tpu_custom_call.1} parent=1 // pred_region
      %97 = dma.done [#allocation3], 256
    $region53: #{tpu_custom_call.1} parent=1 // pred_fallthru
      _
    // Predicated region
    $region54: #{tpu_custom_call.1} parent=1 // pred_check
      _
    $region55: #{tpu_custom_call.1} parent=1 // pred_check_branch
      %99 = sbr.rel (0) target = $region57
    $region56: #{tpu_custom_call.1} parent=1 // pred_region
      %100 = dma.done [#allocation6], 256
    $region57: #{tpu_custom_call.1} parent=1 // pred_fallthru
      _
    // Predicated region
    $region58: #{tpu_custom_call.1} parent=1 // pred_check
      _
    $region59: #{tpu_custom_call.1} parent=1 // pred_check_branch
      %102 = sbr.rel (0) target = $region61
    $region60: #{tpu_custom_call.1} parent=1 // pred_region
      %103 = dma.done [#allocation6], 1024
    $region61: #{tpu_custom_call.1} parent=1 // pred_fallthru
      _
    // Predicated region
    $region62: #{tpu_custom_call.1} parent=1 // pred_check
      _
    $region63: #{tpu_custom_call.1} parent=1 // pred_check_branch
      %105 = sbr.rel (0) target = $region65
    $region64: #{tpu_custom_call.1} parent=1 // pred_region
      %106 = dma.done [#allocation9], 512
    $region65: #{tpu_custom_call.1} parent=1 // pred_fallthru
      _
    // Predicated region
    $region66: #{tpu_custom_call.1} parent=1 // pred_check
      _
    $region67: #{tpu_custom_call.1} parent=1 // pred_check_branch
      %108 = sbr.rel (0) target = $region69
    $region68: #{tpu_custom_call.1} parent=1 // pred_region
      %109 = dma.done [#allocation9], 512
    $region69: #{tpu_custom_call.1} parent=1 // pred_fallthru
      _
    %v110 = vld [vmem:[#allocation2] sm:$0xff]
    %v111 = vld [vmem:[#allocation2 + $0x8] sm:$0xff]
    %v112 = vld [vmem:[#allocation5] sm:$0xff]
    %v113 = vld [vmem:[#allocation5 + $0x8] sm:$0xff]
    %v114 = vld [vmem:[%s3] sm:$0x1]
    %v116 = vlaneseq
    %v117 = vshrl.u32 %v116, 7
    %v118 = vsub.s32 0, %v117
    %v119 = vrot.slane %v114, %v118
    %vm121 = vcmask 130048
    %v123 = vsel %vm121, %v110, 0
    %v126 = vsel %vm121, %v111, 0
    %128 = vmatprep.subr.mxu0 0.0
    %129 = vmatpush1.msra.mxu0 0.0
    %130 = vmatprep.subr.mxu0 0.0
    %131 = vmatpush1.msra.mxu0 0.0
    %132 = vmatprep.subr.mxu0 0.0
    %133 = vmatpush1.msra.mxu0 0.0
    %134 = vmatprep.subr.mxu0 0.0
    %135 = vmatpush1.msra.mxu0 0.0
    %136 = vmatprep.subr.mxu0 0.0
    %137 = vmatpush1.msra.mxu0 0.0
    %138 = vmatprep.subr.mxu0 0.0
    %139 = vmatpush1.msra.mxu0 0.0
    %140 = vmatprep.subr.mxu0 0.0
    %141 = vmatpush1.msra.mxu0 0.0
    %142 = vmatprep.subr.mxu0 0.0
    %143 = vmatpush1.msra.mxu0 0.0
    %144 = vmatprep.subr.mxu0 0.0
    %145 = vmatpush1.msra.mxu0 0.0
    %146 = vmatprep.subr.mxu0 0.0
    %147 = vmatpush1.msra.mxu0 0.0
    %148 = vmatprep.subr.mxu0 0.0
    %149 = vmatpush1.msra.mxu0 0.0
    %150 = vmatprep.subr.mxu0 0.0
    %151 = vmatpush1.msra.mxu0 0.0
    %152 = vmatprep.subr.mxu0 0.0
    %153 = vmatpush1.msra.mxu0 0.0
    %154 = vmatprep.subr.mxu0 0.0
    %155 = vmatpush1.msra.mxu0 0.0
    %156 = vmatprep.subr.mxu0 0.0
    %157 = vmatpush1.msra.mxu0 %v113
    %158 = vmatprep.subr.mxu0 0.0
    %159 = vmatpush1.msra.mxu0 %v112
    %160 = vmatprep.subr.mxu0 0.0
    %161 = vmatpush2.msra.mxu0 0.0
    %162 = vmatprep.subr.mxu0 0.0
    %163 = vmatpush2.msra.mxu0 0.0
    %164 = vmatprep.subr.mxu0 0.0
    %165 = vmatpush2.msra.mxu0 0.0
    %166 = vmatprep.subr.mxu0 0.0
    %167 = vmatpush2.msra.mxu0 0.0
    %168 = vmatprep.subr.mxu0 0.0
    %169 = vmatpush2.msra.mxu0 0.0
    %170 = vmatprep.subr.mxu0 0.0
    %171 = vmatpush2.msra.mxu0 0.0
    %172 = vmatprep.subr.mxu0 0.0
    %173 = vmatpush2.msra.mxu0 0.0
    %174 = vmatprep.subr.mxu0 0.0
    %175 = vmatpush2.msra.mxu0 0.0
    %176 = vmatprep.subr.mxu0 0.0
    %177 = vmatpush2.msra.mxu0 0.0
    %178 = vmatprep.subr.mxu0 0.0
    %179 = vmatpush2.msra.mxu0 0.0
    %180 = vmatprep.subr.mxu0 0.0
    %181 = vmatpush2.msra.mxu0 0.0
    %182 = vmatprep.subr.mxu0 0.0
    %183 = vmatpush2.msra.mxu0 0.0
    %184 = vmatprep.subr.mxu0 0.0
    %185 = vmatpush2.msra.mxu0 0.0
    %186 = vmatprep.subr.mxu0 0.0
    %187 = vmatpush2.msra.mxu0 0.0
    %188 = vmatprep.subr.mxu0 0.0
    %189 = vmatpush2.msra.mxu0 0.0
    %190 = vmatprep.subr.mxu0 0.0
    %191 = vmatpush2.msra.mxu0 0.0
    %192 = vmatprep.mubr.f32.mxu0 0.0
    %193 = vmatmul.mubr.f32.gmra.mxu0 %v123
    %v194 = vpop.f32.mrf.mxu0
    %v195 = vadd.f32 %v119, %v194
    %v196 = vpop.f32.mrf.mxu0
    %197 = vmatprep.mubr.f32.mxu0 0.0
    %198 = vmatmul.mubr.f32.gmra.mxu0 %v126
    %v199 = vpop.f32.mrf.mxu0
    %v200 = vadd.f32 %v119, %v199
    %v201 = vpop.f32.mrf.mxu0
    %202 = vdwg.mxu0
    %v203 = vld [vmem:[%s2] sm:$0xff]
    %v204 = vld [vmem:[%s2 + $0x8] sm:$0xff]
    %v205 = vld [vmem:[%s2 + $0x10] sm:$0xff]
    %v206 = vld [vmem:[%s2 + $0x18] sm:$0xff]
    %v207 = vld [vmem:[#allocation7] sm:$0xff]
    %v208 = vld [vmem:[#allocation7 + $0x8] sm:$0xff]
    %v209 = vld [vmem:[#allocation7 + $0x10] sm:$0xff]
    %v210 = vld [vmem:[#allocation7 + $0x18] sm:$0xff]
    %v211 = vld [vmem:[#allocation7 + $0x20] sm:$0xff]
    %v212 = vld [vmem:[#allocation7 + $0x28] sm:$0xff]
    %v213 = vld [vmem:[#allocation7 + $0x30] sm:$0xff]
    %v214 = vld [vmem:[#allocation7 + $0x38] sm:$0xff]
    %v215 = vld [vmem:[%s5] sm:$0x1]
    %v217 = vlaneseq
    %v218 = vshrl.u32 %v217, 7
    %v219 = vsub.s32 0, %v218
    %v220 = vrot.slane %v215, %v219
    %vm222 = vcmask 261120
    %v224 = vsel %vm222, 0.0, 0
    %226 = vmatprep.subr.mxu0 0.0
    %227 = vmatpush1.msra.mxu0 0.0
    %228 = vmatprep.subr.mxu0 0.0
    %229 = vmatpush1.msra.mxu0 0.0
    %230 = vmatprep.subr.mxu0 0.0
    %231 = vmatpush1.msra.mxu0 0.0
    %232 = vmatprep.subr.mxu0 0.0
    %233 = vmatpush1.msra.mxu0 0.0
    %234 = vmatprep.subr.mxu0 0.0
    %235 = vmatpush1.msra.mxu0 0.0
    %236 = vmatprep.subr.mxu0 0.0
    %237 = vmatpush1.msra.mxu0 0.0
    %238 = vmatprep.subr.mxu0 0.0
    %239 = vmatpush1.msra.mxu0 0.0
    %240 = vmatprep.subr.mxu0 0.0
    %241 = vmatpush1.msra.mxu0 0.0
    %242 = vmatprep.subr.mxu0 0.0
    %243 = vmatpush1.msra.mxu0 0.0
    %244 = vmatprep.subr.mxu0 0.0
    %245 = vmatpush1.msra.mxu0 0.0
    %246 = vmatprep.subr.mxu0 0.0
    %247 = vmatpush1.msra.mxu0 0.0
    %248 = vmatprep.subr.mxu0 0.0
    %249 = vmatpush1.msra.mxu0 0.0
    %250 = vmatprep.subr.mxu0 0.0
    %251 = vmatpush1.msra.mxu0 %v206
    %252 = vmatprep.subr.mxu0 0.0
    %253 = vmatpush1.msra.mxu0 %v205
    %254 = vmatprep.subr.mxu0 0.0
    %255 = vmatpush1.msra.mxu0 %v204
    %256 = vmatprep.subr.mxu0 0.0
    %257 = vmatpush1.msra.mxu0 %v203
    %258 = vmatprep.subr.mxu0 0.0
    %259 = vmatpush2.msra.mxu0 0.0
    %260 = vmatprep.subr.mxu0 0.0
    %261 = vmatpush2.msra.mxu0 0.0
    %262 = vmatprep.subr.mxu0 0.0
    %263 = vmatpush2.msra.mxu0 0.0
    %264 = vmatprep.subr.mxu0 0.0
    %265 = vmatpush2.msra.mxu0 0.0
    %266 = vmatprep.subr.mxu0 0.0
    %267 = vmatpush2.msra.mxu0 0.0
    %268 = vmatprep.subr.mxu0 0.0
    %269 = vmatpush2.msra.mxu0 0.0
    %270 = vmatprep.subr.mxu0 0.0
    %271 = vmatpush2.msra.mxu0 0.0
    %272 = vmatprep.subr.mxu0 0.0
    %273 = vmatpush2.msra.mxu0 0.0
    %274 = vmatprep.subr.mxu0 0.0
    %275 = vmatpush2.msra.mxu0 0.0
    %276 = vmatprep.subr.mxu0 0.0
    %277 = vmatpush2.msra.mxu0 0.0
    %278 = vmatprep.subr.mxu0 0.0
    %279 = vmatpush2.msra.mxu0 0.0
    %280 = vmatprep.subr.mxu0 0.0
    %281 = vmatpush2.msra.mxu0 0.0
    %282 = vmatprep.subr.mxu0 0.0
    %283 = vmatpush2.msra.mxu0 0.0
    %284 = vmatprep.subr.mxu0 0.0
    %285 = vmatpush2.msra.mxu0 0.0
    %286 = vmatprep.subr.mxu0 0.0
    %287 = vmatpush2.msra.mxu0 0.0
    %288 = vmatprep.subr.mxu0 0.0
    %289 = vmatpush2.msra.mxu0 0.0
    %290 = vmatprep.mubr.f32.mxu0 0.0
    %291 = vmatmul.mubr.f32.gmra.mxu0 %v224
    %v292 = vpop.f32.mrf.mxu0
    %v293 = vadd.f32 0.0, %v292
    %v294 = vpop.f32.mrf.mxu0
    %295 = vdwg.mxu0
    %v297 = vrot.slane %v293, 1
    %v300 = vadd.f32 %v195, %v293
    %v301 = vadd.f32 %v200, %v297
    %v302 = vxor.u32 %v300, 2147483648
    %v303 = vxor.u32 %v301, 2147483648
    %v304 = vmul.f32 %v302, 1.442695
    %v305 = vpow.pop %v304
    %v306 = vmul.f32 %v303, 1.442695
    %v307 = vpow.pop %v306
    %v308 = vadd.f32 %v305, 1.0
    %v309 = vadd.f32 %v307, 1.0
    %v310 = vrcp.pop %v308
    %v311 = vmul.f32 1.0, %v310
    %v312 = vrcp.pop %v309
    %v313 = vmul.f32 1.0, %v312
    %v314 = vtanh.pop %v300
    %v315 = vtanh.pop %v301
    %v316 = vmul.f32 %v311, 0.0
    %v317 = vmul.f32 %v313, 0.0
    %320 = vrot.lane.b32.xlu0 %v314, 32
    %v321 = vpop.permute.xlu0 %320
    %322 = vrot.lane.b32.xlu0 %v315, 32
    %v323 = vpop.permute.xlu0 %322
    %v326 = vmul.f32 %v311, %v321
    %v327 = vmul.f32 %v313, %v323
    %330 = vrot.lane.b32.xlu0 %v326, 32
    %v331 = vpop.permute.xlu0 %330
    %332 = vrot.lane.b32.xlu0 %v327, 32
    %v333 = vpop.permute.xlu0 %332
    %v336 = vadd.f32 %v316, %v331
    %v337 = vadd.f32 %v317, %v333
    %v338 = vtanh.pop %v336
    %v339 = vtanh.pop %v337
    %342 = vrot.lane.b32.xlu0 %v338, 32
    %v343 = vpop.permute.xlu0 %342
    %344 = vrot.lane.b32.xlu0 %v339, 32
    %v345 = vpop.permute.xlu0 %344
    %v348 = vmul.f32 %v311, %v343
    %v349 = vmul.f32 %v313, %v345
    %v352 = vrot.slane %v349, 7
    %vm353 = vcmask 1041409
    %v354 = vsel %vm353, %v352, %v348
    %355 = vrot.lane.b32.xlu0 %v354, 64
    %v356 = vpop.permute.xlu0 %355
    %v358 = vsel %vm222, %v356, 0.0
    %vm359 = vcmask 523264
    %v361 = vsel %vm359, %v358, 0
    %363 = vmatprep.subr.mxu0 0.0
    %364 = vmatpush1.msra.mxu0 0.0
    %365 = vmatprep.subr.mxu0 0.0
    %366 = vmatpush1.msra.mxu0 0.0
    %367 = vmatprep.subr.mxu0 0.0
    %368 = vmatpush1.msra.mxu0 0.0
    %369 = vmatprep.subr.mxu0 0.0
    %370 = vmatpush1.msra.mxu0 0.0
    %371 = vmatprep.subr.mxu0 0.0
    %372 = vmatpush1.msra.mxu0 0.0
    %373 = vmatprep.subr.mxu0 0.0
    %374 = vmatpush1.msra.mxu0 0.0
    %375 = vmatprep.subr.mxu0 0.0
    %376 = vmatpush1.msra.mxu0 0.0
    %377 = vmatprep.subr.mxu0 0.0
    %378 = vmatpush1.msra.mxu0 0.0
    %379 = vmatprep.subr.mxu0 0.0
    %380 = vmatpush1.msra.mxu0 %v214
    %381 = vmatprep.subr.mxu0 0.0
    %382 = vmatpush1.msra.mxu0 %v213
    %383 = vmatprep.subr.mxu0 0.0
    %384 = vmatpush1.msra.mxu0 %v212
    %385 = vmatprep.subr.mxu0 0.0
    %386 = vmatpush1.msra.mxu0 %v211
    %387 = vmatprep.subr.mxu0 0.0
    %388 = vmatpush1.msra.mxu0 %v210
    %389 = vmatprep.subr.mxu0 0.0
    %390 = vmatpush1.msra.mxu0 %v209
    %391 = vmatprep.subr.mxu0 0.0
    %392 = vmatpush1.msra.mxu0 %v208
    %393 = vmatprep.subr.mxu0 0.0
    %394 = vmatpush1.msra.mxu0 %v207
    %395 = vmatprep.subr.mxu0 0.0
    %396 = vmatpush2.msra.mxu0 0.0
    %397 = vmatprep.subr.mxu0 0.0
    %398 = vmatpush2.msra.mxu0 0.0
    %399 = vmatprep.subr.mxu0 0.0
    %400 = vmatpush2.msra.mxu0 0.0
    %401 = vmatprep.subr.mxu0 0.0
    %402 = vmatpush2.msra.mxu0 0.0
    %403 = vmatprep.subr.mxu0 0.0
    %404 = vmatpush2.msra.mxu0 0.0
    %405 = vmatprep.subr.mxu0 0.0
    %406 = vmatpush2.msra.mxu0 0.0
    %407 = vmatprep.subr.mxu0 0.0
    %408 = vmatpush2.msra.mxu0 0.0
    %409 = vmatprep.subr.mxu0 0.0
    %410 = vmatpush2.msra.mxu0 0.0
    %411 = vmatprep.subr.mxu0 0.0
    %412 = vmatpush2.msra.mxu0 0.0
    %413 = vmatprep.subr.mxu0 0.0
    %414 = vmatpush2.msra.mxu0 0.0
    %415 = vmatprep.subr.mxu0 0.0
    %416 = vmatpush2.msra.mxu0 0.0
    %417 = vmatprep.subr.mxu0 0.0
    %418 = vmatpush2.msra.mxu0 0.0
    %419 = vmatprep.subr.mxu0 0.0
    %420 = vmatpush2.msra.mxu0 0.0
    %421 = vmatprep.subr.mxu0 0.0
    %422 = vmatpush2.msra.mxu0 0.0
    %423 = vmatprep.subr.mxu0 0.0
    %424 = vmatpush2.msra.mxu0 0.0
    %425 = vmatprep.subr.mxu0 0.0
    %426 = vmatpush2.msra.mxu0 0.0
    %427 = vmatprep.mubr.f32.mxu0 0.0
    %428 = vmatmul.mubr.f32.gmra.mxu0 %v361
    %v429 = vpop.f32.mrf.mxu0
    %v430 = vadd.f32 %v220, %v429
    %v431 = vpop.f32.mrf.mxu0
    %432 = vdwg.mxu0
    %v433 = vxor.u32 %v430, 2147483648
    %v434 = vmul.f32 %v433, 1.442695
    %v435 = vpow.pop %v434
    %v436 = vadd.f32 %v435, 1.0
    %v437 = vrcp.pop %v436
    %v438 = vmul.f32 1.0, %v437
    %v439 = vtanh.pop %v430
    %v440 = vmul.f32 %v438, 0.0
    %442 = vrot.lane.b32.xlu0 %v439, 32
    %v443 = vpop.permute.xlu0 %442
    %v445 = vmul.f32 %v438, %v443
    %447 = vrot.lane.b32.xlu0 %v445, 32
    %v448 = vpop.permute.xlu0 %447
    %v450 = vadd.f32 %v440, %v448
    %v451 = vtanh.pop %v450
    %453 = vrot.lane.b32.xlu0 %v451, 32
    %v454 = vpop.permute.xlu0 %453
    %v456 = vmul.f32 %v438, %v454
    %v457 = vsel %vm222, %v356, 0
    %459 = vmatprep.subr.mxu0 0.0
    %460 = vmatpush1.msra.mxu0 0.0
    %461 = vmatprep.subr.mxu0 0.0
    %462 = vmatpush1.msra.mxu0 0.0
    %463 = vmatprep.subr.mxu0 0.0
    %464 = vmatpush1.msra.mxu0 0.0
    %465 = vmatprep.subr.mxu0 0.0
    %466 = vmatpush1.msra.mxu0 0.0
    %467 = vmatprep.subr.mxu0 0.0
    %468 = vmatpush1.msra.mxu0 0.0
    %469 = vmatprep.subr.mxu0 0.0
    %470 = vmatpush1.msra.mxu0 0.0
    %471 = vmatprep.subr.mxu0 0.0
    %472 = vmatpush1.msra.mxu0 0.0
    %473 = vmatprep.subr.mxu0 0.0
    %474 = vmatpush1.msra.mxu0 0.0
    %475 = vmatprep.subr.mxu0 0.0
    %476 = vmatpush1.msra.mxu0 0.0
    %477 = vmatprep.subr.mxu0 0.0
    %478 = vmatpush1.msra.mxu0 0.0
    %479 = vmatprep.subr.mxu0 0.0
    %480 = vmatpush1.msra.mxu0 0.0
    %481 = vmatprep.subr.mxu0 0.0
    %482 = vmatpush1.msra.mxu0 0.0
    %483 = vmatprep.subr.mxu0 0.0
    %484 = vmatpush1.msra.mxu0 %v206
    %485 = vmatprep.subr.mxu0 0.0
    %486 = vmatpush1.msra.mxu0 %v205
    %487 = vmatprep.subr.mxu0 0.0
    %488 = vmatpush1.msra.mxu0 %v204
    %489 = vmatprep.subr.mxu0 0.0
    %490 = vmatpush1.msra.mxu0 %v203
    %491 = vmatprep.subr.mxu0 0.0
    %492 = vmatpush2.msra.mxu0 0.0
    %493 = vmatprep.subr.mxu0 0.0
    %494 = vmatpush2.msra.mxu0 0.0
    %495 = vmatprep.subr.mxu0 0.0
    %496 = vmatpush2.msra.mxu0 0.0
    %497 = vmatprep.subr.mxu0 0.0
    %498 = vmatpush2.msra.mxu0 0.0
    %499 = vmatprep.subr.mxu0 0.0
    %500 = vmatpush2.msra.mxu0 0.0
    %501 = vmatprep.subr.mxu0 0.0
    %502 = vmatpush2.msra.mxu0 0.0
    %503 = vmatprep.subr.mxu0 0.0
    %504 = vmatpush2.msra.mxu0 0.0
    %505 = vmatprep.subr.mxu0 0.0
    %506 = vmatpush2.msra.mxu0 0.0
    %507 = vmatprep.subr.mxu0 0.0
    %508 = vmatpush2.msra.mxu0 0.0
    %509 = vmatprep.subr.mxu0 0.0
    %510 = vmatpush2.msra.mxu0 0.0
    %511 = vmatprep.subr.mxu0 0.0
    %512 = vmatpush2.msra.mxu0 0.0
    %513 = vmatprep.subr.mxu0 0.0
    %514 = vmatpush2.msra.mxu0 0.0
    %515 = vmatprep.subr.mxu0 0.0
    %516 = vmatpush2.msra.mxu0 0.0
    %517 = vmatprep.subr.mxu0 0.0
    %518 = vmatpush2.msra.mxu0 0.0
    %519 = vmatprep.subr.mxu0 0.0
    %520 = vmatpush2.msra.mxu0 0.0
    %521 = vmatprep.subr.mxu0 0.0
    %522 = vmatpush2.msra.mxu0 0.0
    %523 = vmatprep.mubr.f32.mxu0 0.0
    %524 = vmatmul.mubr.f32.gmra.mxu0 %v457
    %v525 = vpop.f32.mrf.mxu0
    %v526 = vadd.f32 0.0, %v525
    %v527 = vpop.f32.mrf.mxu0
    %528 = vdwg.mxu0
    %v530 = vrot.slane %v526, 7
    %v533 = vadd.f32 %v195, %v530
    %v534 = vadd.f32 %v200, %v526
    %v535 = vxor.u32 %v533, 2147483648
    %v536 = vxor.u32 %v534, 2147483648
    %v537 = vmul.f32 %v535, 1.442695
    %v538 = vpow.pop %v537
    %v539 = vmul.f32 %v536, 1.442695
    %v540 = vpow.pop %v539
    %v541 = vadd.f32 %v538, 1.0
    %v542 = vadd.f32 %v540, 1.0
    %v543 = vrcp.pop %v541
    %v544 = vmul.f32 1.0, %v543
    %v545 = vrcp.pop %v542
    %v546 = vmul.f32 1.0, %v545
    %v547 = vtanh.pop %v533
    %v548 = vtanh.pop %v534
    %v551 = vrot.slane %v336, 7
    %v552 = vrot.slane %v337, 7
    %v555 = vmul.f32 %v544, %v551
    %v556 = vmul.f32 %v546, %v552
    %559 = vrot.lane.b32.xlu0 %v547, 32
    %v560 = vpop.permute.xlu0 %559
    %561 = vrot.lane.b32.xlu0 %v548, 32
    %v562 = vpop.permute.xlu0 %561
    %v565 = vmul.f32 %v544, %v560
    %v566 = vmul.f32 %v546, %v562
    %569 = vrot.lane.b32.xlu0 %v565, 32
    %v570 = vpop.permute.xlu0 %569
    %571 = vrot.lane.b32.xlu0 %v566, 32
    %v572 = vpop.permute.xlu0 %571
    %v575 = vadd.f32 %v555, %v570
    %v576 = vadd.f32 %v556, %v572
    %v577 = vtanh.pop %v575
    %v578 = vtanh.pop %v576
    %581 = vrot.lane.b32.xlu0 %v577, 32
    %v582 = vpop.permute.xlu0 %581
    %583 = vrot.lane.b32.xlu0 %v578, 32
    %v584 = vpop.permute.xlu0 %583
    %v587 = vmul.f32 %v544, %v582
    %v588 = vmul.f32 %v546, %v584
    %v591 = vrot.slane %v588, 7
    %vm592 = vcmask 1042434
    %v593 = vsel %vm592, %v591, %v587
    %594 = vrot.lane.b32.xlu0 %v593, 64
    %v595 = vpop.permute.xlu0 %594
    %v598 = vrot.slane %v456, 7
    %599 = vrot.lane.b32.xlu0 %v598, 96
    %v600 = vpop.permute.xlu0 %599
    %v602 = vsel %vm222, %v595, %v600
    %v604 = vrot.slane %v602, 1
    %v605 = vsel %vm359, %v604, 0
    %607 = vmatprep.subr.mxu0 0.0
    %608 = vmatpush1.msra.mxu0 0.0
    %609 = vmatprep.subr.mxu0 0.0
    %610 = vmatpush1.msra.mxu0 0.0
    %611 = vmatprep.subr.mxu0 0.0
    %612 = vmatpush1.msra.mxu0 0.0
    %613 = vmatprep.subr.mxu0 0.0
    %614 = vmatpush1.msra.mxu0 0.0
    %615 = vmatprep.subr.mxu0 0.0
    %616 = vmatpush1.msra.mxu0 0.0
    %617 = vmatprep.subr.mxu0 0.0
    %618 = vmatpush1.msra.mxu0 0.0
    %619 = vmatprep.subr.mxu0 0.0
    %620 = vmatpush1.msra.mxu0 0.0
    %621 = vmatprep.subr.mxu0 0.0
    %622 = vmatpush1.msra.mxu0 0.0
    %623 = vmatprep.subr.mxu0 0.0
    %624 = vmatpush1.msra.mxu0 %v214
    %625 = vmatprep.subr.mxu0 0.0
    %626 = vmatpush1.msra.mxu0 %v213
    %627 = vmatprep.subr.mxu0 0.0
    %628 = vmatpush1.msra.mxu0 %v212
    %629 = vmatprep.subr.mxu0 0.0
    %630 = vmatpush1.msra.mxu0 %v211
    %631 = vmatprep.subr.mxu0 0.0
    %632 = vmatpush1.msra.mxu0 %v210
    %633 = vmatprep.subr.mxu0 0.0
    %634 = vmatpush1.msra.mxu0 %v209
    %635 = vmatprep.subr.mxu0 0.0
    %636 = vmatpush1.msra.mxu0 %v208
    %637 = vmatprep.subr.mxu0 0.0
    %638 = vmatpush1.msra.mxu0 %v207
    %639 = vmatprep.subr.mxu0 0.0
    %640 = vmatpush2.msra.mxu0 0.0
    %641 = vmatprep.subr.mxu0 0.0
    %642 = vmatpush2.msra.mxu0 0.0
    %643 = vmatprep.subr.mxu0 0.0
    %644 = vmatpush2.msra.mxu0 0.0
    %645 = vmatprep.subr.mxu0 0.0
    %646 = vmatpush2.msra.mxu0 0.0
    %647 = vmatprep.subr.mxu0 0.0
    %648 = vmatpush2.msra.mxu0 0.0
    %649 = vmatprep.subr.mxu0 0.0
    %650 = vmatpush2.msra.mxu0 0.0
    %651 = vmatprep.subr.mxu0 0.0
    %652 = vmatpush2.msra.mxu0 0.0
    %653 = vmatprep.subr.mxu0 0.0
    %654 = vmatpush2.msra.mxu0 0.0
    %655 = vmatprep.subr.mxu0 0.0
    %656 = vmatpush2.msra.mxu0 0.0
    %657 = vmatprep.subr.mxu0 0.0
    %658 = vmatpush2.msra.mxu0 0.0
    %659 = vmatprep.subr.mxu0 0.0
    %660 = vmatpush2.msra.mxu0 0.0
    %661 = vmatprep.subr.mxu0 0.0
    %662 = vmatpush2.msra.mxu0 0.0
    %663 = vmatprep.subr.mxu0 0.0
    %664 = vmatpush2.msra.mxu0 0.0
    %665 = vmatprep.subr.mxu0 0.0
    %666 = vmatpush2.msra.mxu0 0.0
    %667 = vmatprep.subr.mxu0 0.0
    %668 = vmatpush2.msra.mxu0 0.0
    %669 = vmatprep.subr.mxu0 0.0
    %670 = vmatpush2.msra.mxu0 0.0
    %671 = vmatprep.mubr.f32.mxu0 0.0
    %672 = vmatmul.mubr.f32.gmra.mxu0 %v605
    %v673 = vpop.f32.mrf.mxu0
    %v674 = vadd.f32 %v220, %v673
    %v675 = vpop.f32.mrf.mxu0
    %676 = vdwg.mxu0
    %v677 = vxor.u32 %v674, 2147483648
    %v678 = vmul.f32 %v677, 1.442695
    %v679 = vpow.pop %v678
    %v680 = vadd.f32 %v679, 1.0
    %v681 = vrcp.pop %v680
    %v682 = vmul.f32 1.0, %v681
    %v683 = vtanh.pop %v674
    %v684 = vmul.f32 %v682, %v450
    %686 = vrot.lane.b32.xlu0 %v683, 32
    %v687 = vpop.permute.xlu0 %686
    %v689 = vmul.f32 %v682, %v687
    %691 = vrot.lane.b32.xlu0 %v689, 32
    %v692 = vpop.permute.xlu0 %691
    %v694 = vadd.f32 %v684, %v692
    %v695 = vtanh.pop %v694
    %697 = vrot.lane.b32.xlu0 %v695, 32
    %v698 = vpop.permute.xlu0 %697
    %v700 = vmul.f32 %v682, %v698
    %v701 = vrot.slane %v587, 1
    %v702 = vsel %vm353, %v588, %v701
    %703 = vrot.lane.b32.xlu0 %v702, 64
    %v704 = vpop.permute.xlu0 %703
    %v705 = vsel %vm222, %v704, 0
    %707 = vmatprep.subr.mxu0 0.0
    %708 = vmatpush1.msra.mxu0 0.0
    %709 = vmatprep.subr.mxu0 0.0
    %710 = vmatpush1.msra.mxu0 0.0
    %711 = vmatprep.subr.mxu0 0.0
    %712 = vmatpush1.msra.mxu0 0.0
    %713 = vmatprep.subr.mxu0 0.0
    %714 = vmatpush1.msra.mxu0 0.0
    %715 = vmatprep.subr.mxu0 0.0
    %716 = vmatpush1.msra.mxu0 0.0
    %717 = vmatprep.subr.mxu0 0.0
    %718 = vmatpush1.msra.mxu0 0.0
    %719 = vmatprep.subr.mxu0 0.0
    %720 = vmatpush1.msra.mxu0 0.0
    %721 = vmatprep.subr.mxu0 0.0
    %722 = vmatpush1.msra.mxu0 0.0
    %723 = vmatprep.subr.mxu0 0.0
    %724 = vmatpush1.msra.mxu0 0.0
    %725 = vmatprep.subr.mxu0 0.0
    %726 = vmatpush1.msra.mxu0 0.0
    %727 = vmatprep.subr.mxu0 0.0
    %728 = vmatpush1.msra.mxu0 0.0
    %729 = vmatprep.subr.mxu0 0.0
    %730 = vmatpush1.msra.mxu0 0.0
    %731 = vmatprep.subr.mxu0 0.0
    %732 = vmatpush1.msra.mxu0 %v206
    %733 = vmatprep.subr.mxu0 0.0
    %734 = vmatpush1.msra.mxu0 %v205
    %735 = vmatprep.subr.mxu0 0.0
    %736 = vmatpush1.msra.mxu0 %v204
    %737 = vmatprep.subr.mxu0 0.0
    %738 = vmatpush1.msra.mxu0 %v203
    %739 = vmatprep.subr.mxu0 0.0
    %740 = vmatpush2.msra.mxu0 0.0
    %741 = vmatprep.subr.mxu0 0.0
    %742 = vmatpush2.msra.mxu0 0.0
    %743 = vmatprep.subr.mxu0 0.0
    %744 = vmatpush2.msra.mxu0 0.0
    %745 = vmatprep.subr.mxu0 0.0
    %746 = vmatpush2.msra.mxu0 0.0
    %747 = vmatprep.subr.mxu0 0.0
    %748 = vmatpush2.msra.mxu0 0.0
    %749 = vmatprep.subr.mxu0 0.0
    %750 = vmatpush2.msra.mxu0 0.0
    %751 = vmatprep.subr.mxu0 0.0
    %752 = vmatpush2.msra.mxu0 0.0
    %753 = vmatprep.subr.mxu0 0.0
    %754 = vmatpush2.msra.mxu0 0.0
    %755 = vmatprep.subr.mxu0 0.0
    %756 = vmatpush2.msra.mxu0 0.0
    %757 = vmatprep.subr.mxu0 0.0
    %758 = vmatpush2.msra.mxu0 0.0
    %759 = vmatprep.subr.mxu0 0.0
    %760 = vmatpush2.msra.mxu0 0.0
    %761 = vmatprep.subr.mxu0 0.0
    %762 = vmatpush2.msra.mxu0 0.0
    %763 = vmatprep.subr.mxu0 0.0
    %764 = vmatpush2.msra.mxu0 0.0
    %765 = vmatprep.subr.mxu0 0.0
    %766 = vmatpush2.msra.mxu0 0.0
    %767 = vmatprep.subr.mxu0 0.0
    %768 = vmatpush2.msra.mxu0 0.0
    %769 = vmatprep.subr.mxu0 0.0
    %770 = vmatpush2.msra.mxu0 0.0
    %771 = vmatprep.mubr.f32.mxu0 0.0
    %772 = vmatmul.mubr.f32.gmra.mxu0 %v705
    %v773 = vpop.f32.mrf.mxu0
    %v774 = vadd.f32 0.0, %v773
    %v775 = vpop.f32.mrf.mxu0
    %776 = vdwg.mxu0
    %v778 = vrot.slane %v774, 6
    %v779 = vrot.slane %v774, 7
    %v782 = vadd.f32 %v195, %v778
    %v783 = vadd.f32 %v200, %v779
    %v784 = vxor.u32 %v782, 2147483648
    %v785 = vxor.u32 %v783, 2147483648
    %v786 = vmul.f32 %v784, 1.442695
    %v787 = vpow.pop %v786
    %v788 = vmul.f32 %v785, 1.442695
    %v789 = vpow.pop %v788
    %v790 = vadd.f32 %v787, 1.0
    %v791 = vadd.f32 %v789, 1.0
    %v792 = vrcp.pop %v790
    %v793 = vmul.f32 1.0, %v792
    %v794 = vrcp.pop %v791
    %v795 = vmul.f32 1.0, %v794
    %v796 = vtanh.pop %v782
    %v797 = vtanh.pop %v783
    %v800 = vrot.slane %v575, 7
    %v801 = vrot.slane %v576, 7
    %v804 = vmul.f32 %v793, %v800
    %v805 = vmul.f32 %v795, %v801
    %808 = vrot.lane.b32.xlu0 %v796, 32
    %v809 = vpop.permute.xlu0 %808
    %810 = vrot.lane.b32.xlu0 %v797, 32
    %v811 = vpop.permute.xlu0 %810
    %v814 = vmul.f32 %v793, %v809
    %v815 = vmul.f32 %v795, %v811
    %818 = vrot.lane.b32.xlu0 %v814, 32
    %v819 = vpop.permute.xlu0 %818
    %820 = vrot.lane.b32.xlu0 %v815, 32
    %v821 = vpop.permute.xlu0 %820
    %v824 = vadd.f32 %v804, %v819
    %v825 = vadd.f32 %v805, %v821
    %v826 = vtanh.pop %v824
    %v827 = vtanh.pop %v825
    %830 = vrot.lane.b32.xlu0 %v826, 32
    %v831 = vpop.permute.xlu0 %830
    %832 = vrot.lane.b32.xlu0 %v827, 32
    %v833 = vpop.permute.xlu0 %832
    %v836 = vmul.f32 %v793, %v831
    %v837 = vmul.f32 %v795, %v833
    %v840 = vrot.slane %v837, 7
    %vm841 = vcmask 1043459
    %v842 = vsel %vm841, %v840, %v836
    %843 = vrot.lane.b32.xlu0 %v842, 64
    %v844 = vpop.permute.xlu0 %843
    %v847 = vrot.slane %v700, 6
    %848 = vrot.lane.b32.xlu0 %v847, 96
    %v849 = vpop.permute.xlu0 %848
    %v851 = vsel %vm222, %v844, %v849
    %v853 = vrot.slane %v851, 2
    %v854 = vsel %vm359, %v853, 0
    %856 = vmatprep.subr.mxu0 0.0
    %857 = vmatpush1.msra.mxu0 0.0
    %858 = vmatprep.subr.mxu0 0.0
    %859 = vmatpush1.msra.mxu0 0.0
    %860 = vmatprep.subr.mxu0 0.0
    %861 = vmatpush1.msra.mxu0 0.0
    %862 = vmatprep.subr.mxu0 0.0
    %863 = vmatpush1.msra.mxu0 0.0
    %864 = vmatprep.subr.mxu0 0.0
    %865 = vmatpush1.msra.mxu0 0.0
    %866 = vmatprep.subr.mxu0 0.0
    %867 = vmatpush1.msra.mxu0 0.0
    %868 = vmatprep.subr.mxu0 0.0
    %869 = vmatpush1.msra.mxu0 0.0
    %870 = vmatprep.subr.mxu0 0.0
    %871 = vmatpush1.msra.mxu0 0.0
    %872 = vmatprep.subr.mxu0 0.0
    %873 = vmatpush1.msra.mxu0 %v214
    %874 = vmatprep.subr.mxu0 0.0
    %875 = vmatpush1.msra.mxu0 %v213
    %876 = vmatprep.subr.mxu0 0.0
    %877 = vmatpush1.msra.mxu0 %v212
    %878 = vmatprep.subr.mxu0 0.0
    %879 = vmatpush1.msra.mxu0 %v211
    %880 = vmatprep.subr.mxu0 0.0
    %881 = vmatpush1.msra.mxu0 %v210
    %882 = vmatprep.subr.mxu0 0.0
    %883 = vmatpush1.msra.mxu0 %v209
    %884 = vmatprep.subr.mxu0 0.0
    %885 = vmatpush1.msra.mxu0 %v208
    %886 = vmatprep.subr.mxu0 0.0
    %887 = vmatpush1.msra.mxu0 %v207
    %888 = vmatprep.subr.mxu0 0.0
    %889 = vmatpush2.msra.mxu0 0.0
    %890 = vmatprep.subr.mxu0 0.0
    %891 = vmatpush2.msra.mxu0 0.0
    %892 = vmatprep.subr.mxu0 0.0
    %893 = vmatpush2.msra.mxu0 0.0
    %894 = vmatprep.subr.mxu0 0.0
    %895 = vmatpush2.msra.mxu0 0.0
    %896 = vmatprep.subr.mxu0 0.0
    %897 = vmatpush2.msra.mxu0 0.0
    %898 = vmatprep.subr.mxu0 0.0
    %899 = vmatpush2.msra.mxu0 0.0
    %900 = vmatprep.subr.mxu0 0.0
    %901 = vmatpush2.msra.mxu0 0.0
    %902 = vmatprep.subr.mxu0 0.0
    %903 = vmatpush2.msra.mxu0 0.0
    %904 = vmatprep.subr.mxu0 0.0
    %905 = vmatpush2.msra.mxu0 0.0
    %906 = vmatprep.subr.mxu0 0.0
    %907 = vmatpush2.msra.mxu0 0.0
    %908 = vmatprep.subr.mxu0 0.0
    %909 = vmatpush2.msra.mxu0 0.0
    %910 = vmatprep.subr.mxu0 0.0
    %911 = vmatpush2.msra.mxu0 0.0
    %912 = vmatprep.subr.mxu0 0.0
    %913 = vmatpush2.msra.mxu0 0.0
    %914 = vmatprep.subr.mxu0 0.0
    %915 = vmatpush2.msra.mxu0 0.0
    %916 = vmatprep.subr.mxu0 0.0
    %917 = vmatpush2.msra.mxu0 0.0
    %918 = vmatprep.subr.mxu0 0.0
    %919 = vmatpush2.msra.mxu0 0.0
    %920 = vmatprep.mubr.f32.mxu0 0.0
    %921 = vmatmul.mubr.f32.gmra.mxu0 %v854
    %v922 = vpop.f32.mrf.mxu0
    %v923 = vadd.f32 %v220, %v922
    %v924 = vpop.f32.mrf.mxu0
    %925 = vdwg.mxu0
    %v926 = vxor.u32 %v923, 2147483648
    %v927 = vmul.f32 %v926, 1.442695
    %v928 = vpow.pop %v927
    %v929 = vadd.f32 %v928, 1.0
    %v930 = vrcp.pop %v929
    %v931 = vmul.f32 1.0, %v930
    %v932 = vtanh.pop %v923
    %v933 = vmul.f32 %v931, %v694
    %935 = vrot.lane.b32.xlu0 %v932, 32
    %v936 = vpop.permute.xlu0 %935
    %v938 = vmul.f32 %v931, %v936
    %940 = vrot.lane.b32.xlu0 %v938, 32
    %v941 = vpop.permute.xlu0 %940
    %v943 = vadd.f32 %v933, %v941
    %v944 = vtanh.pop %v943
    %946 = vrot.lane.b32.xlu0 %v944, 32
    %v947 = vpop.permute.xlu0 %946
    %v949 = vmul.f32 %v931, %v947
    %v950 = vrot.slane %v836, 2
    %v951 = vrot.slane %v837, 1
    %v952 = vsel %vm353, %v951, %v950
    %953 = vrot.lane.b32.xlu0 %v952, 64
    %v954 = vpop.permute.xlu0 %953
    %v955 = vsel %vm222, %v954, 0
    %957 = vmatprep.subr.mxu0 0.0
    %958 = vmatpush1.msra.mxu0 0.0
    %959 = vmatprep.subr.mxu0 0.0
    %960 = vmatpush1.msra.mxu0 0.0
    %961 = vmatprep.subr.mxu0 0.0
    %962 = vmatpush1.msra.mxu0 0.0
    %963 = vmatprep.subr.mxu0 0.0
    %964 = vmatpush1.msra.mxu0 0.0
    %965 = vmatprep.subr.mxu0 0.0
    %966 = vmatpush1.msra.mxu0 0.0
    %967 = vmatprep.subr.mxu0 0.0
    %968 = vmatpush1.msra.mxu0 0.0
    %969 = vmatprep.subr.mxu0 0.0
    %970 = vmatpush1.msra.mxu0 0.0
    %971 = vmatprep.subr.mxu0 0.0
    %972 = vmatpush1.msra.mxu0 0.0
    %973 = vmatprep.subr.mxu0 0.0
    %974 = vmatpush1.msra.mxu0 0.0
    %975 = vmatprep.subr.mxu0 0.0
    %976 = vmatpush1.msra.mxu0 0.0
    %977 = vmatprep.subr.mxu0 0.0
    %978 = vmatpush1.msra.mxu0 0.0
    %979 = vmatprep.subr.mxu0 0.0
    %980 = vmatpush1.msra.mxu0 0.0
    %981 = vmatprep.subr.mxu0 0.0
    %982 = vmatpush1.msra.mxu0 %v206
    %983 = vmatprep.subr.mxu0 0.0
    %984 = vmatpush1.msra.mxu0 %v205
    %985 = vmatprep.subr.mxu0 0.0
    %986 = vmatpush1.msra.mxu0 %v204
    %987 = vmatprep.subr.mxu0 0.0
    %988 = vmatpush1.msra.mxu0 %v203
    %989 = vmatprep.subr.mxu0 0.0
    %990 = vmatpush2.msra.mxu0 0.0
    %991 = vmatprep.subr.mxu0 0.0
    %992 = vmatpush2.msra.mxu0 0.0
    %993 = vmatprep.subr.mxu0 0.0
    %994 = vmatpush2.msra.mxu0 0.0
    %995 = vmatprep.subr.mxu0 0.0
    %996 = vmatpush2.msra.mxu0 0.0
    %997 = vmatprep.subr.mxu0 0.0
    %998 = vmatpush2.msra.mxu0 0.0
    %999 = vmatprep.subr.mxu0 0.0
    %1000 = vmatpush2.msra.mxu0 0.0
    %1001 = vmatprep.subr.mxu0 0.0
    %1002 = vmatpush2.msra.mxu0 0.0
    %1003 = vmatprep.subr.mxu0 0.0
    %1004 = vmatpush2.msra.mxu0 0.0
    %1005 = vmatprep.subr.mxu0 0.0
    %1006 = vmatpush2.msra.mxu0 0.0
    %1007 = vmatprep.subr.mxu0 0.0
    %1008 = vmatpush2.msra.mxu0 0.0
    %1009 = vmatprep.subr.mxu0 0.0
    %1010 = vmatpush2.msra.mxu0 0.0
    %1011 = vmatprep.subr.mxu0 0.0
    %1012 = vmatpush2.msra.mxu0 0.0
    %1013 = vmatprep.subr.mxu0 0.0
    %1014 = vmatpush2.msra.mxu0 0.0
    %1015 = vmatprep.subr.mxu0 0.0
    %1016 = vmatpush2.msra.mxu0 0.0
    %1017 = vmatprep.subr.mxu0 0.0
    %1018 = vmatpush2.msra.mxu0 0.0
    %1019 = vmatprep.subr.mxu0 0.0
    %1020 = vmatpush2.msra.mxu0 0.0
    %1021 = vmatprep.mubr.f32.mxu0 0.0
    %1022 = vmatmul.mubr.f32.gmra.mxu0 %v955
    %v1023 = vpop.f32.mrf.mxu0
    %v1024 = vadd.f32 0.0, %v1023
    %v1025 = vpop.f32.mrf.mxu0
    %1026 = vdwg.mxu0
    %v1028 = vrot.slane %v1024, 5
    %v1029 = vrot.slane %v1024, 6
    %v1032 = vadd.f32 %v195, %v1028
    %v1033 = vadd.f32 %v200, %v1029
    %v1034 = vxor.u32 %v1032, 2147483648
    %v1035 = vxor.u32 %v1033, 2147483648
    %v1036 = vmul.f32 %v1034, 1.442695
    %v1037 = vpow.pop %v1036
    %v1038 = vmul.f32 %v1035, 1.442695
    %v1039 = vpow.pop %v1038
    %v1040 = vadd.f32 %v1037, 1.0
    %v1041 = vadd.f32 %v1039, 1.0
    %v1042 = vrcp.pop %v1040
    %v1043 = vmul.f32 1.0, %v1042
    %v1044 = vrcp.pop %v1041
    %v1045 = vmul.f32 1.0, %v1044
    %v1046 = vtanh.pop %v1032
    %v1047 = vtanh.pop %v1033
    %v1050 = vrot.slane %v824, 7
    %v1051 = vrot.slane %v825, 7
    %v1054 = vmul.f32 %v1043, %v1050
    %v1055 = vmul.f32 %v1045, %v1051
    %1058 = vrot.lane.b32.xlu0 %v1046, 32
    %v1059 = vpop.permute.xlu0 %1058
    %1060 = vrot.lane.b32.xlu0 %v1047, 32
    %v1061 = vpop.permute.xlu0 %1060
    %v1064 = vmul.f32 %v1043, %v1059
    %v1065 = vmul.f32 %v1045, %v1061
    %1068 = vrot.lane.b32.xlu0 %v1064, 32
    %v1069 = vpop.permute.xlu0 %1068
    %1070 = vrot.lane.b32.xlu0 %v1065, 32
    %v1071 = vpop.permute.xlu0 %1070
    %v1074 = vadd.f32 %v1054, %v1069
    %v1075 = vadd.f32 %v1055, %v1071
    %v1076 = vtanh.pop %v1074
    %v1077 = vtanh.pop %v1075
    %1080 = vrot.lane.b32.xlu0 %v1076, 32
    %v1081 = vpop.permute.xlu0 %1080
    %1082 = vrot.lane.b32.xlu0 %v1077, 32
    %v1083 = vpop.permute.xlu0 %1082
    %v1086 = vmul.f32 %v1043, %v1081
    %v1087 = vmul.f32 %v1045, %v1083
    %v1090 = vrot.slane %v1087, 7
    %vm1091 = vcmask 1044484
    %v1092 = vsel %vm1091, %v1090, %v1086
    %1093 = vrot.lane.b32.xlu0 %v1092, 64
    %v1094 = vpop.permute.xlu0 %1093
    %v1097 = vrot.slane %v949, 5
    %1098 = vrot.lane.b32.xlu0 %v1097, 96
    %v1099 = vpop.permute.xlu0 %1098
    %v1101 = vsel %vm222, %v1094, %v1099
    %v1103 = vrot.slane %v1101, 3
    %v1104 = vsel %vm359, %v1103, 0
    %1106 = vmatprep.subr.mxu0 0.0
    %1107 = vmatpush1.msra.mxu0 0.0
    %1108 = vmatprep.subr.mxu0 0.0
    %1109 = vmatpush1.msra.mxu0 0.0
    %1110 = vmatprep.subr.mxu0 0.0
    %1111 = vmatpush1.msra.mxu0 0.0
    %1112 = vmatprep.subr.mxu0 0.0
    %1113 = vmatpush1.msra.mxu0 0.0
    %1114 = vmatprep.subr.mxu0 0.0
    %1115 = vmatpush1.msra.mxu0 0.0
    %1116 = vmatprep.subr.mxu0 0.0
    %1117 = vmatpush1.msra.mxu0 0.0
    %1118 = vmatprep.subr.mxu0 0.0
    %1119 = vmatpush1.msra.mxu0 0.0
    %1120 = vmatprep.subr.mxu0 0.0
    %1121 = vmatpush1.msra.mxu0 0.0
    %1122 = vmatprep.subr.mxu0 0.0
    %1123 = vmatpush1.msra.mxu0 %v214
    %1124 = vmatprep.subr.mxu0 0.0
    %1125 = vmatpush1.msra.mxu0 %v213
    %1126 = vmatprep.subr.mxu0 0.0
    %1127 = vmatpush1.msra.mxu0 %v212
    %1128 = vmatprep.subr.mxu0 0.0
    %1129 = vmatpush1.msra.mxu0 %v211
    %1130 = vmatprep.subr.mxu0 0.0
    %1131 = vmatpush1.msra.mxu0 %v210
    %1132 = vmatprep.subr.mxu0 0.0
    %1133 = vmatpush1.msra.mxu0 %v209
    %1134 = vmatprep.subr.mxu0 0.0
    %1135 = vmatpush1.msra.mxu0 %v208
    %1136 = vmatprep.subr.mxu0 0.0
    %1137 = vmatpush1.msra.mxu0 %v207
    %1138 = vmatprep.subr.mxu0 0.0
    %1139 = vmatpush2.msra.mxu0 0.0
    %1140 = vmatprep.subr.mxu0 0.0
    %1141 = vmatpush2.msra.mxu0 0.0
    %1142 = vmatprep.subr.mxu0 0.0
    %1143 = vmatpush2.msra.mxu0 0.0
    %1144 = vmatprep.subr.mxu0 0.0
    %1145 = vmatpush2.msra.mxu0 0.0
    %1146 = vmatprep.subr.mxu0 0.0
    %1147 = vmatpush2.msra.mxu0 0.0
    %1148 = vmatprep.subr.mxu0 0.0
    %1149 = vmatpush2.msra.mxu0 0.0
    %1150 = vmatprep.subr.mxu0 0.0
    %1151 = vmatpush2.msra.mxu0 0.0
    %1152 = vmatprep.subr.mxu0 0.0
    %1153 = vmatpush2.msra.mxu0 0.0
    %1154 = vmatprep.subr.mxu0 0.0
    %1155 = vmatpush2.msra.mxu0 0.0
    %1156 = vmatprep.subr.mxu0 0.0
    %1157 = vmatpush2.msra.mxu0 0.0
    %1158 = vmatprep.subr.mxu0 0.0
    %1159 = vmatpush2.msra.mxu0 0.0
    %1160 = vmatprep.subr.mxu0 0.0
    %1161 = vmatpush2.msra.mxu0 0.0
    %1162 = vmatprep.subr.mxu0 0.0
    %1163 = vmatpush2.msra.mxu0 0.0
    %1164 = vmatprep.subr.mxu0 0.0
    %1165 = vmatpush2.msra.mxu0 0.0
    %1166 = vmatprep.subr.mxu0 0.0
    %1167 = vmatpush2.msra.mxu0 0.0
    %1168 = vmatprep.subr.mxu0 0.0
    %1169 = vmatpush2.msra.mxu0 0.0
    %1170 = vmatprep.mubr.f32.mxu0 0.0
    %1171 = vmatmul.mubr.f32.gmra.mxu0 %v1104
    %v1172 = vpop.f32.mrf.mxu0
    %v1173 = vadd.f32 %v220, %v1172
    %v1174 = vpop.f32.mrf.mxu0
    %1175 = vdwg.mxu0
    %v1176 = vxor.u32 %v1173, 2147483648
    %v1177 = vmul.f32 %v1176, 1.442695
    %v1178 = vpow.pop %v1177
    %v1179 = vadd.f32 %v1178, 1.0
    %v1180 = vrcp.pop %v1179
    %v1181 = vmul.f32 1.0, %v1180
    %v1182 = vtanh.pop %v1173
    %v1183 = vmul.f32 %v1181, %v943
    %1185 = vrot.lane.b32.xlu0 %v1182, 32
    %v1186 = vpop.permute.xlu0 %1185
    %v1188 = vmul.f32 %v1181, %v1186
    %1190 = vrot.lane.b32.xlu0 %v1188, 32
    %v1191 = vpop.permute.xlu0 %1190
    %v1193 = vadd.f32 %v1183, %v1191
    %v1194 = vtanh.pop %v1193
    %1196 = vrot.lane.b32.xlu0 %v1194, 32
    %v1197 = vpop.permute.xlu0 %1196
    %v1199 = vmul.f32 %v1181, %v1197
    %v1200 = vrot.slane %v1086, 3
    %v1201 = vrot.slane %v1087, 2
    %v1202 = vsel %vm353, %v1201, %v1200
    %1203 = vrot.lane.b32.xlu0 %v1202, 64
    %v1204 = vpop.permute.xlu0 %1203
    %v1205 = vsel %vm222, %v1204, 0
    %1207 = vmatprep.subr.mxu0 0.0
    %1208 = vmatpush1.msra.mxu0 0.0
    %1209 = vmatprep.subr.mxu0 0.0
    %1210 = vmatpush1.msra.mxu0 0.0
    %1211 = vmatprep.subr.mxu0 0.0
    %1212 = vmatpush1.msra.mxu0 0.0
    %1213 = vmatprep.subr.mxu0 0.0
    %1214 = vmatpush1.msra.mxu0 0.0
    %1215 = vmatprep.subr.mxu0 0.0
    %1216 = vmatpush1.msra.mxu0 0.0
    %1217 = vmatprep.subr.mxu0 0.0
    %1218 = vmatpush1.msra.mxu0 0.0
    %1219 = vmatprep.subr.mxu0 0.0
    %1220 = vmatpush1.msra.mxu0 0.0
    %1221 = vmatprep.subr.mxu0 0.0
    %1222 = vmatpush1.msra.mxu0 0.0
    %1223 = vmatprep.subr.mxu0 0.0
    %1224 = vmatpush1.msra.mxu0 0.0
    %1225 = vmatprep.subr.mxu0 0.0
    %1226 = vmatpush1.msra.mxu0 0.0
    %1227 = vmatprep.subr.mxu0 0.0
    %1228 = vmatpush1.msra.mxu0 0.0
    %1229 = vmatprep.subr.mxu0 0.0
    %1230 = vmatpush1.msra.mxu0 0.0
    %1231 = vmatprep.subr.mxu0 0.0
    %1232 = vmatpush1.msra.mxu0 %v206
    %1233 = vmatprep.subr.mxu0 0.0
    %1234 = vmatpush1.msra.mxu0 %v205
    %1235 = vmatprep.subr.mxu0 0.0
    %1236 = vmatpush1.msra.mxu0 %v204
    %1237 = vmatprep.subr.mxu0 0.0
    %1238 = vmatpush1.msra.mxu0 %v203
    %1239 = vmatprep.subr.mxu0 0.0
    %1240 = vmatpush2.msra.mxu0 0.0
    %1241 = vmatprep.subr.mxu0 0.0
    %1242 = vmatpush2.msra.mxu0 0.0
    %1243 = vmatprep.subr.mxu0 0.0
    %1244 = vmatpush2.msra.mxu0 0.0
    %1245 = vmatprep.subr.mxu0 0.0
    %1246 = vmatpush2.msra.mxu0 0.0
    %1247 = vmatprep.subr.mxu0 0.0
    %1248 = vmatpush2.msra.mxu0 0.0
    %1249 = vmatprep.subr.mxu0 0.0
    %1250 = vmatpush2.msra.mxu0 0.0
    %1251 = vmatprep.subr.mxu0 0.0
    %1252 = vmatpush2.msra.mxu0 0.0
    %1253 = vmatprep.subr.mxu0 0.0
    %1254 = vmatpush2.msra.mxu0 0.0
    %1255 = vmatprep.subr.mxu0 0.0
    %1256 = vmatpush2.msra.mxu0 0.0
    %1257 = vmatprep.subr.mxu0 0.0
    %1258 = vmatpush2.msra.mxu0 0.0
    %1259 = vmatprep.subr.mxu0 0.0
    %1260 = vmatpush2.msra.mxu0 0.0
    %1261 = vmatprep.subr.mxu0 0.0
    %1262 = vmatpush2.msra.mxu0 0.0
    %1263 = vmatprep.subr.mxu0 0.0
    %1264 = vmatpush2.msra.mxu0 0.0
    %1265 = vmatprep.subr.mxu0 0.0
    %1266 = vmatpush2.msra.mxu0 0.0
    %1267 = vmatprep.subr.mxu0 0.0
    %1268 = vmatpush2.msra.mxu0 0.0
    %1269 = vmatprep.subr.mxu0 0.0
    %1270 = vmatpush2.msra.mxu0 0.0
    %1271 = vmatprep.mubr.f32.mxu0 0.0
    %1272 = vmatmul.mubr.f32.gmra.mxu0 %v1205
    %v1273 = vpop.f32.mrf.mxu0
    %v1274 = vadd.f32 0.0, %v1273
    %v1275 = vpop.f32.mrf.mxu0
    %1276 = vdwg.mxu0
    %v1278 = vrot.slane %v1274, 4
    %v1279 = vrot.slane %v1274, 5
    %v1282 = vadd.f32 %v195, %v1278
    %v1283 = vadd.f32 %v200, %v1279
    %v1284 = vxor.u32 %v1282, 2147483648
    %v1285 = vxor.u32 %v1283, 2147483648
    %v1286 = vmul.f32 %v1284, 1.442695
    %v1287 = vpow.pop %v1286
    %v1288 = vmul.f32 %v1285, 1.442695
    %v1289 = vpow.pop %v1288
    %v1290 = vadd.f32 %v1287, 1.0
    %v1291 = vadd.f32 %v1289, 1.0
    %v1292 = vrcp.pop %v1290
    %v1293 = vmul.f32 1.0, %v1292
    %v1294 = vrcp.pop %v1291
    %v1295 = vmul.f32 1.0, %v1294
    %v1296 = vtanh.pop %v1282
    %v1297 = vtanh.pop %v1283
    %v1300 = vrot.slane %v1074, 7
    %v1301 = vrot.slane %v1075, 7
    %v1304 = vmul.f32 %v1293, %v1300
    %v1305 = vmul.f32 %v1295, %v1301
    %1308 = vrot.lane.b32.xlu0 %v1296, 32
    %v1309 = vpop.permute.xlu0 %1308
    %1310 = vrot.lane.b32.xlu0 %v1297, 32
    %v1311 = vpop.permute.xlu0 %1310
    %v1314 = vmul.f32 %v1293, %v1309
    %v1315 = vmul.f32 %v1295, %v1311
    %1318 = vrot.lane.b32.xlu0 %v1314, 32
    %v1319 = vpop.permute.xlu0 %1318
    %1320 = vrot.lane.b32.xlu0 %v1315, 32
    %v1321 = vpop.permute.xlu0 %1320
    %v1324 = vadd.f32 %v1304, %v1319
    %v1325 = vadd.f32 %v1305, %v1321
    %v1326 = vtanh.pop %v1324
    %v1327 = vtanh.pop %v1325
    %1330 = vrot.lane.b32.xlu0 %v1326, 32
    %v1331 = vpop.permute.xlu0 %1330
    %1332 = vrot.lane.b32.xlu0 %v1327, 32
    %v1333 = vpop.permute.xlu0 %1332
    %v1336 = vmul.f32 %v1293, %v1331
    %v1337 = vmul.f32 %v1295, %v1333
    %v1340 = vrot.slane %v1337, 7
    %vm1341 = vcmask 1045509
    %v1342 = vsel %vm1341, %v1340, %v1336
    %1343 = vrot.lane.b32.xlu0 %v1342, 64
    %v1344 = vpop.permute.xlu0 %1343
    %v1347 = vrot.slane %v1199, 4
    %1348 = vrot.lane.b32.xlu0 %v1347, 96
    %v1349 = vpop.permute.xlu0 %1348
    %v1351 = vsel %vm222, %v1344, %v1349
    %v1353 = vrot.slane %v1351, 4
    %v1354 = vsel %vm359, %v1353, 0
    %1356 = vmatprep.subr.mxu0 0.0
    %1357 = vmatpush1.msra.mxu0 0.0
    %1358 = vmatprep.subr.mxu0 0.0
    %1359 = vmatpush1.msra.mxu0 0.0
    %1360 = vmatprep.subr.mxu0 0.0
    %1361 = vmatpush1.msra.mxu0 0.0
    %1362 = vmatprep.subr.mxu0 0.0
    %1363 = vmatpush1.msra.mxu0 0.0
    %1364 = vmatprep.subr.mxu0 0.0
    %1365 = vmatpush1.msra.mxu0 0.0
    %1366 = vmatprep.subr.mxu0 0.0
    %1367 = vmatpush1.msra.mxu0 0.0
    %1368 = vmatprep.subr.mxu0 0.0
    %1369 = vmatpush1.msra.mxu0 0.0
    %1370 = vmatprep.subr.mxu0 0.0
    %1371 = vmatpush1.msra.mxu0 0.0
    %1372 = vmatprep.subr.mxu0 0.0
    %1373 = vmatpush1.msra.mxu0 %v214
    %1374 = vmatprep.subr.mxu0 0.0
    %1375 = vmatpush1.msra.mxu0 %v213
    %1376 = vmatprep.subr.mxu0 0.0
    %1377 = vmatpush1.msra.mxu0 %v212
    %1378 = vmatprep.subr.mxu0 0.0
    %1379 = vmatpush1.msra.mxu0 %v211
    %1380 = vmatprep.subr.mxu0 0.0
    %1381 = vmatpush1.msra.mxu0 %v210
    %1382 = vmatprep.subr.mxu0 0.0
    %1383 = vmatpush1.msra.mxu0 %v209
    %1384 = vmatprep.subr.mxu0 0.0
    %1385 = vmatpush1.msra.mxu0 %v208
    %1386 = vmatprep.subr.mxu0 0.0
    %1387 = vmatpush1.msra.mxu0 %v207
    %1388 = vmatprep.subr.mxu0 0.0
    %1389 = vmatpush2.msra.mxu0 0.0
    %1390 = vmatprep.subr.mxu0 0.0
    %1391 = vmatpush2.msra.mxu0 0.0
    %1392 = vmatprep.subr.mxu0 0.0
    %1393 = vmatpush2.msra.mxu0 0.0
    %1394 = vmatprep.subr.mxu0 0.0
    %1395 = vmatpush2.msra.mxu0 0.0
    %1396 = vmatprep.subr.mxu0 0.0
    %1397 = vmatpush2.msra.mxu0 0.0
    %1398 = vmatprep.subr.mxu0 0.0
    %1399 = vmatpush2.msra.mxu0 0.0
    %1400 = vmatprep.subr.mxu0 0.0
    %1401 = vmatpush2.msra.mxu0 0.0
    %1402 = vmatprep.subr.mxu0 0.0
    %1403 = vmatpush2.msra.mxu0 0.0
    %1404 = vmatprep.subr.mxu0 0.0
    %1405 = vmatpush2.msra.mxu0 0.0
    %1406 = vmatprep.subr.mxu0 0.0
    %1407 = vmatpush2.msra.mxu0 0.0
    %1408 = vmatprep.subr.mxu0 0.0
    %1409 = vmatpush2.msra.mxu0 0.0
    %1410 = vmatprep.subr.mxu0 0.0
    %1411 = vmatpush2.msra.mxu0 0.0
    %1412 = vmatprep.subr.mxu0 0.0
    %1413 = vmatpush2.msra.mxu0 0.0
    %1414 = vmatprep.subr.mxu0 0.0
    %1415 = vmatpush2.msra.mxu0 0.0
    %1416 = vmatprep.subr.mxu0 0.0
    %1417 = vmatpush2.msra.mxu0 0.0
    %1418 = vmatprep.subr.mxu0 0.0
    %1419 = vmatpush2.msra.mxu0 0.0
    %1420 = vmatprep.mubr.f32.mxu0 0.0
    %1421 = vmatmul.mubr.f32.gmra.mxu0 %v1354
    %v1422 = vpop.f32.mrf.mxu0
    %v1423 = vadd.f32 %v220, %v1422
    %v1424 = vpop.f32.mrf.mxu0
    %1425 = vdwg.mxu0
    %v1426 = vxor.u32 %v1423, 2147483648
    %v1427 = vmul.f32 %v1426, 1.442695
    %v1428 = vpow.pop %v1427
    %v1429 = vadd.f32 %v1428, 1.0
    %v1430 = vrcp.pop %v1429
    %v1431 = vmul.f32 1.0, %v1430
    %v1432 = vtanh.pop %v1423
    %v1433 = vmul.f32 %v1431, %v1193
    %1435 = vrot.lane.b32.xlu0 %v1432, 32
    %v1436 = vpop.permute.xlu0 %1435
    %v1438 = vmul.f32 %v1431, %v1436
    %1440 = vrot.lane.b32.xlu0 %v1438, 32
    %v1441 = vpop.permute.xlu0 %1440
    %v1443 = vadd.f32 %v1433, %v1441
    %v1444 = vtanh.pop %v1443
    %1446 = vrot.lane.b32.xlu0 %v1444, 32
    %v1447 = vpop.permute.xlu0 %1446
    %v1449 = vmul.f32 %v1431, %v1447
    %v1450 = vrot.slane %v1336, 4
    %v1451 = vrot.slane %v1337, 3
    %v1452 = vsel %vm353, %v1451, %v1450
    %1453 = vrot.lane.b32.xlu0 %v1452, 64
    %v1454 = vpop.permute.xlu0 %1453
    %v1455 = vsel %vm222, %v1454, 0
    %1457 = vmatprep.subr.mxu0 0.0
    %1458 = vmatpush1.msra.mxu0 0.0
    %1459 = vmatprep.subr.mxu0 0.0
    %1460 = vmatpush1.msra.mxu0 0.0
    %1461 = vmatprep.subr.mxu0 0.0
    %1462 = vmatpush1.msra.mxu0 0.0
    %1463 = vmatprep.subr.mxu0 0.0
    %1464 = vmatpush1.msra.mxu0 0.0
    %1465 = vmatprep.subr.mxu0 0.0
    %1466 = vmatpush1.msra.mxu0 0.0
    %1467 = vmatprep.subr.mxu0 0.0
    %1468 = vmatpush1.msra.mxu0 0.0
    %1469 = vmatprep.subr.mxu0 0.0
    %1470 = vmatpush1.msra.mxu0 0.0
    %1471 = vmatprep.subr.mxu0 0.0
    %1472 = vmatpush1.msra.mxu0 0.0
    %1473 = vmatprep.subr.mxu0 0.0
    %1474 = vmatpush1.msra.mxu0 0.0
    %1475 = vmatprep.subr.mxu0 0.0
    %1476 = vmatpush1.msra.mxu0 0.0
    %1477 = vmatprep.subr.mxu0 0.0
    %1478 = vmatpush1.msra.mxu0 0.0
    %1479 = vmatprep.subr.mxu0 0.0
    %1480 = vmatpush1.msra.mxu0 0.0
    %1481 = vmatprep.subr.mxu0 0.0
    %1482 = vmatpush1.msra.mxu0 %v206
    %1483 = vmatprep.subr.mxu0 0.0
    %1484 = vmatpush1.msra.mxu0 %v205
    %1485 = vmatprep.subr.mxu0 0.0
    %1486 = vmatpush1.msra.mxu0 %v204
    %1487 = vmatprep.subr.mxu0 0.0
    %1488 = vmatpush1.msra.mxu0 %v203
    %1489 = vmatprep.subr.mxu0 0.0
    %1490 = vmatpush2.msra.mxu0 0.0
    %1491 = vmatprep.subr.mxu0 0.0
    %1492 = vmatpush2.msra.mxu0 0.0
    %1493 = vmatprep.subr.mxu0 0.0
    %1494 = vmatpush2.msra.mxu0 0.0
    %1495 = vmatprep.subr.mxu0 0.0
    %1496 = vmatpush2.msra.mxu0 0.0
    %1497 = vmatprep.subr.mxu0 0.0
    %1498 = vmatpush2.msra.mxu0 0.0
    %1499 = vmatprep.subr.mxu0 0.0
    %1500 = vmatpush2.msra.mxu0 0.0
    %1501 = vmatprep.subr.mxu0 0.0
    %1502 = vmatpush2.msra.mxu0 0.0
    %1503 = vmatprep.subr.mxu0 0.0
    %1504 = vmatpush2.msra.mxu0 0.0
    %1505 = vmatprep.subr.mxu0 0.0
    %1506 = vmatpush2.msra.mxu0 0.0
    %1507 = vmatprep.subr.mxu0 0.0
    %1508 = vmatpush2.msra.mxu0 0.0
    %1509 = vmatprep.subr.mxu0 0.0
    %1510 = vmatpush2.msra.mxu0 0.0
    %1511 = vmatprep.subr.mxu0 0.0
    %1512 = vmatpush2.msra.mxu0 0.0
    %1513 = vmatprep.subr.mxu0 0.0
    %1514 = vmatpush2.msra.mxu0 0.0
    %1515 = vmatprep.subr.mxu0 0.0
    %1516 = vmatpush2.msra.mxu0 0.0
    %1517 = vmatprep.subr.mxu0 0.0
    %1518 = vmatpush2.msra.mxu0 0.0
    %1519 = vmatprep.subr.mxu0 0.0
    %1520 = vmatpush2.msra.mxu0 0.0
    %1521 = vmatprep.mubr.f32.mxu0 0.0
    %1522 = vmatmul.mubr.f32.gmra.mxu0 %v1455
    %v1523 = vpop.f32.mrf.mxu0
    %v1524 = vadd.f32 0.0, %v1523
    %v1525 = vpop.f32.mrf.mxu0
    %1526 = vdwg.mxu0
    %v1528 = vrot.slane %v1524, 3
    %v1529 = vrot.slane %v1524, 4
    %v1532 = vadd.f32 %v195, %v1528
    %v1533 = vadd.f32 %v200, %v1529
    %v1534 = vxor.u32 %v1532, 2147483648
    %v1535 = vxor.u32 %v1533, 2147483648
    %v1536 = vmul.f32 %v1534, 1.442695
    %v1537 = vpow.pop %v1536
    %v1538 = vmul.f32 %v1535, 1.442695
    %v1539 = vpow.pop %v1538
    %v1540 = vadd.f32 %v1537, 1.0
    %v1541 = vadd.f32 %v1539, 1.0
    %v1542 = vrcp.pop %v1540
    %v1543 = vmul.f32 1.0, %v1542
    %v1544 = vrcp.pop %v1541
    %v1545 = vmul.f32 1.0, %v1544
    %v1546 = vtanh.pop %v1532
    %v1547 = vtanh.pop %v1533
    %v1550 = vrot.slane %v1324, 7
    %v1551 = vrot.slane %v1325, 7
    %v1554 = vmul.f32 %v1543, %v1550
    %v1555 = vmul.f32 %v1545, %v1551
    %1558 = vrot.lane.b32.xlu0 %v1546, 32
    %v1559 = vpop.permute.xlu0 %1558
    %1560 = vrot.lane.b32.xlu0 %v1547, 32
    %v1561 = vpop.permute.xlu0 %1560
    %v1564 = vmul.f32 %v1543, %v1559
    %v1565 = vmul.f32 %v1545, %v1561
    %1568 = vrot.lane.b32.xlu0 %v1564, 32
    %v1569 = vpop.permute.xlu0 %1568
    %1570 = vrot.lane.b32.xlu0 %v1565, 32
    %v1571 = vpop.permute.xlu0 %1570
    %v1574 = vadd.f32 %v1554, %v1569
    %v1575 = vadd.f32 %v1555, %v1571
    %v1576 = vtanh.pop %v1574
    %v1577 = vtanh.pop %v1575
    %1580 = vrot.lane.b32.xlu0 %v1576, 32
    %v1581 = vpop.permute.xlu0 %1580
    %1582 = vrot.lane.b32.xlu0 %v1577, 32
    %v1583 = vpop.permute.xlu0 %1582
    %v1586 = vmul.f32 %v1543, %v1581
    %v1587 = vmul.f32 %v1545, %v1583
    %v1590 = vrot.slane %v1587, 7
    %vm1591 = vcmask 1046534
    %v1592 = vsel %vm1591, %v1590, %v1586
    %1593 = vrot.lane.b32.xlu0 %v1592, 64
    %v1594 = vpop.permute.xlu0 %1593
    %v1597 = vrot.slane %v1449, 3
    %1598 = vrot.lane.b32.xlu0 %v1597, 96
    %v1599 = vpop.permute.xlu0 %1598
    %v1601 = vsel %vm222, %v1594, %v1599
    %v1603 = vrot.slane %v1601, 5
    %v1604 = vsel %vm359, %v1603, 0
    %1606 = vmatprep.subr.mxu0 0.0
    %1607 = vmatpush1.msra.mxu0 0.0
    %1608 = vmatprep.subr.mxu0 0.0
    %1609 = vmatpush1.msra.mxu0 0.0
    %1610 = vmatprep.subr.mxu0 0.0
    %1611 = vmatpush1.msra.mxu0 0.0
    %1612 = vmatprep.subr.mxu0 0.0
    %1613 = vmatpush1.msra.mxu0 0.0
    %1614 = vmatprep.subr.mxu0 0.0
    %1615 = vmatpush1.msra.mxu0 0.0
    %1616 = vmatprep.subr.mxu0 0.0
    %1617 = vmatpush1.msra.mxu0 0.0
    %1618 = vmatprep.subr.mxu0 0.0
    %1619 = vmatpush1.msra.mxu0 0.0
    %1620 = vmatprep.subr.mxu0 0.0
    %1621 = vmatpush1.msra.mxu0 0.0
    %1622 = vmatprep.subr.mxu0 0.0
    %1623 = vmatpush1.msra.mxu0 %v214
    %1624 = vmatprep.subr.mxu0 0.0
    %1625 = vmatpush1.msra.mxu0 %v213
    %1626 = vmatprep.subr.mxu0 0.0
    %1627 = vmatpush1.msra.mxu0 %v212
    %1628 = vmatprep.subr.mxu0 0.0
    %1629 = vmatpush1.msra.mxu0 %v211
    %1630 = vmatprep.subr.mxu0 0.0
    %1631 = vmatpush1.msra.mxu0 %v210
    %1632 = vmatprep.subr.mxu0 0.0
    %1633 = vmatpush1.msra.mxu0 %v209
    %1634 = vmatprep.subr.mxu0 0.0
    %1635 = vmatpush1.msra.mxu0 %v208
    %1636 = vmatprep.subr.mxu0 0.0
    %1637 = vmatpush1.msra.mxu0 %v207
    %1638 = vmatprep.subr.mxu0 0.0
    %1639 = vmatpush2.msra.mxu0 0.0
    %1640 = vmatprep.subr.mxu0 0.0
    %1641 = vmatpush2.msra.mxu0 0.0
    %1642 = vmatprep.subr.mxu0 0.0
    %1643 = vmatpush2.msra.mxu0 0.0
    %1644 = vmatprep.subr.mxu0 0.0
    %1645 = vmatpush2.msra.mxu0 0.0
    %1646 = vmatprep.subr.mxu0 0.0
    %1647 = vmatpush2.msra.mxu0 0.0
    %1648 = vmatprep.subr.mxu0 0.0
    %1649 = vmatpush2.msra.mxu0 0.0
    %1650 = vmatprep.subr.mxu0 0.0
    %1651 = vmatpush2.msra.mxu0 0.0
    %1652 = vmatprep.subr.mxu0 0.0
    %1653 = vmatpush2.msra.mxu0 0.0
    %1654 = vmatprep.subr.mxu0 0.0
    %1655 = vmatpush2.msra.mxu0 0.0
    %1656 = vmatprep.subr.mxu0 0.0
    %1657 = vmatpush2.msra.mxu0 0.0
    %1658 = vmatprep.subr.mxu0 0.0
    %1659 = vmatpush2.msra.mxu0 0.0
    %1660 = vmatprep.subr.mxu0 0.0
    %1661 = vmatpush2.msra.mxu0 0.0
    %1662 = vmatprep.subr.mxu0 0.0
    %1663 = vmatpush2.msra.mxu0 0.0
    %1664 = vmatprep.subr.mxu0 0.0
    %1665 = vmatpush2.msra.mxu0 0.0
    %1666 = vmatprep.subr.mxu0 0.0
    %1667 = vmatpush2.msra.mxu0 0.0
    %1668 = vmatprep.subr.mxu0 0.0
    %1669 = vmatpush2.msra.mxu0 0.0
    %1670 = vmatprep.mubr.f32.mxu0 0.0
    %1671 = vmatmul.mubr.f32.gmra.mxu0 %v1604
    %v1672 = vpop.f32.mrf.mxu0
    %v1673 = vadd.f32 %v220, %v1672
    %v1674 = vpop.f32.mrf.mxu0
    %1675 = vdwg.mxu0
    %v1676 = vxor.u32 %v1673, 2147483648
    %v1677 = vmul.f32 %v1676, 1.442695
    %v1678 = vpow.pop %v1677
    %v1679 = vadd.f32 %v1678, 1.0
    %v1680 = vrcp.pop %v1679
    %v1681 = vmul.f32 1.0, %v1680
    %v1682 = vtanh.pop %v1673
    %v1683 = vmul.f32 %v1681, %v1443
    %1685 = vrot.lane.b32.xlu0 %v1682, 32
    %v1686 = vpop.permute.xlu0 %1685
    %v1688 = vmul.f32 %v1681, %v1686
    %1690 = vrot.lane.b32.xlu0 %v1688, 32
    %v1691 = vpop.permute.xlu0 %1690
    %v1693 = vadd.f32 %v1683, %v1691
    %v1694 = vtanh.pop %v1693
    %1696 = vrot.lane.b32.xlu0 %v1694, 32
    %v1697 = vpop.permute.xlu0 %1696
    %v1699 = vmul.f32 %v1681, %v1697
    %v1700 = vrot.slane %v1586, 5
    %v1701 = vrot.slane %v1587, 4
    %v1702 = vsel %vm353, %v1701, %v1700
    %1703 = vrot.lane.b32.xlu0 %v1702, 64
    %v1704 = vpop.permute.xlu0 %1703
    %v1705 = vsel %vm222, %v1704, 0
    %1707 = vmatprep.subr.mxu0 0.0
    %1708 = vmatpush1.msra.mxu0 0.0
    %1709 = vmatprep.subr.mxu0 0.0
    %1710 = vmatpush1.msra.mxu0 0.0
    %1711 = vmatprep.subr.mxu0 0.0
    %1712 = vmatpush1.msra.mxu0 0.0
    %1713 = vmatprep.subr.mxu0 0.0
    %1714 = vmatpush1.msra.mxu0 0.0
    %1715 = vmatprep.subr.mxu0 0.0
    %1716 = vmatpush1.msra.mxu0 0.0
    %1717 = vmatprep.subr.mxu0 0.0
    %1718 = vmatpush1.msra.mxu0 0.0
    %1719 = vmatprep.subr.mxu0 0.0
    %1720 = vmatpush1.msra.mxu0 0.0
    %1721 = vmatprep.subr.mxu0 0.0
    %1722 = vmatpush1.msra.mxu0 0.0
    %1723 = vmatprep.subr.mxu0 0.0
    %1724 = vmatpush1.msra.mxu0 0.0
    %1725 = vmatprep.subr.mxu0 0.0
    %1726 = vmatpush1.msra.mxu0 0.0
    %1727 = vmatprep.subr.mxu0 0.0
    %1728 = vmatpush1.msra.mxu0 0.0
    %1729 = vmatprep.subr.mxu0 0.0
    %1730 = vmatpush1.msra.mxu0 0.0
    %1731 = vmatprep.subr.mxu0 0.0
    %1732 = vmatpush1.msra.mxu0 %v206
    %1733 = vmatprep.subr.mxu0 0.0
    %1734 = vmatpush1.msra.mxu0 %v205
    %1735 = vmatprep.subr.mxu0 0.0
    %1736 = vmatpush1.msra.mxu0 %v204
    %1737 = vmatprep.subr.mxu0 0.0
    %1738 = vmatpush1.msra.mxu0 %v203
    %1739 = vmatprep.subr.mxu0 0.0
    %1740 = vmatpush2.msra.mxu0 0.0
    %1741 = vmatprep.subr.mxu0 0.0
    %1742 = vmatpush2.msra.mxu0 0.0
    %1743 = vmatprep.subr.mxu0 0.0
    %1744 = vmatpush2.msra.mxu0 0.0
    %1745 = vmatprep.subr.mxu0 0.0
    %1746 = vmatpush2.msra.mxu0 0.0
    %1747 = vmatprep.subr.mxu0 0.0
    %1748 = vmatpush2.msra.mxu0 0.0
    %1749 = vmatprep.subr.mxu0 0.0
    %1750 = vmatpush2.msra.mxu0 0.0
    %1751 = vmatprep.subr.mxu0 0.0
    %1752 = vmatpush2.msra.mxu0 0.0
    %1753 = vmatprep.subr.mxu0 0.0
    %1754 = vmatpush2.msra.mxu0 0.0
    %1755 = vmatprep.subr.mxu0 0.0
    %1756 = vmatpush2.msra.mxu0 0.0
    %1757 = vmatprep.subr.mxu0 0.0
    %1758 = vmatpush2.msra.mxu0 0.0
    %1759 = vmatprep.subr.mxu0 0.0
    %1760 = vmatpush2.msra.mxu0 0.0
    %1761 = vmatprep.subr.mxu0 0.0
    %1762 = vmatpush2.msra.mxu0 0.0
    %1763 = vmatprep.subr.mxu0 0.0
    %1764 = vmatpush2.msra.mxu0 0.0
    %1765 = vmatprep.subr.mxu0 0.0
    %1766 = vmatpush2.msra.mxu0 0.0
    %1767 = vmatprep.subr.mxu0 0.0
    %1768 = vmatpush2.msra.mxu0 0.0
    %1769 = vmatprep.subr.mxu0 0.0
    %1770 = vmatpush2.msra.mxu0 0.0
    %1771 = vmatprep.mubr.f32.mxu0 0.0
    %1772 = vmatmul.mubr.f32.gmra.mxu0 %v1705
    %v1773 = vpop.f32.mrf.mxu0
    %v1774 = vadd.f32 0.0, %v1773
    %v1775 = vpop.f32.mrf.mxu0
    %1776 = vdwg.mxu0
    %v1778 = vrot.slane %v1774, 2
    %v1779 = vrot.slane %v1774, 3
    %v1782 = vadd.f32 %v195, %v1778
    %v1783 = vadd.f32 %v200, %v1779
    %v1784 = vxor.u32 %v1782, 2147483648
    %v1785 = vxor.u32 %v1783, 2147483648
    %v1786 = vmul.f32 %v1784, 1.442695
    %v1787 = vpow.pop %v1786
    %v1788 = vmul.f32 %v1785, 1.442695
    %v1789 = vpow.pop %v1788
    %v1790 = vadd.f32 %v1787, 1.0
    %v1791 = vadd.f32 %v1789, 1.0
    %v1792 = vrcp.pop %v1790
    %v1793 = vmul.f32 1.0, %v1792
    %v1794 = vrcp.pop %v1791
    %v1795 = vmul.f32 1.0, %v1794
    %v1796 = vtanh.pop %v1782
    %v1797 = vtanh.pop %v1783
    %v1800 = vrot.slane %v1574, 7
    %v1801 = vrot.slane %v1575, 7
    %v1804 = vmul.f32 %v1793, %v1800
    %v1805 = vmul.f32 %v1795, %v1801
    %1808 = vrot.lane.b32.xlu0 %v1796, 32
    %v1809 = vpop.permute.xlu0 %1808
    %1810 = vrot.lane.b32.xlu0 %v1797, 32
    %v1811 = vpop.permute.xlu0 %1810
    %v1814 = vmul.f32 %v1793, %v1809
    %v1815 = vmul.f32 %v1795, %v1811
    %1818 = vrot.lane.b32.xlu0 %v1814, 32
    %v1819 = vpop.permute.xlu0 %1818
    %1820 = vrot.lane.b32.xlu0 %v1815, 32
    %v1821 = vpop.permute.xlu0 %1820
    %v1824 = vadd.f32 %v1804, %v1819
    %v1825 = vadd.f32 %v1805, %v1821
    %v1826 = vtanh.pop %v1824
    %v1827 = vtanh.pop %v1825
    %1830 = vrot.lane.b32.xlu0 %v1826, 32
    %v1831 = vpop.permute.xlu0 %1830
    %1832 = vrot.lane.b32.xlu0 %v1827, 32
    %v1833 = vpop.permute.xlu0 %1832
    %v1836 = vmul.f32 %v1793, %v1831
    %v1837 = vmul.f32 %v1795, %v1833
    %v1840 = vrot.slane %v1837, 7
    %vm1841 = vcmask 1047559
    %v1842 = vsel %vm1841, %v1840, %v1836
    %1843 = vrot.lane.b32.xlu0 %v1842, 64
    %v1844 = vpop.permute.xlu0 %1843
    %v1847 = vrot.slane %v1699, 2
    %1848 = vrot.lane.b32.xlu0 %v1847, 96
    %v1849 = vpop.permute.xlu0 %1848
    %v1851 = vsel %vm222, %v1844, %v1849
    %v1853 = vrot.slane %v1851, 6
    %v1854 = vsel %vm359, %v1853, 0
    %1856 = vmatprep.subr.mxu0 0.0
    %1857 = vmatpush1.msra.mxu0 0.0
    %1858 = vmatprep.subr.mxu0 0.0
    %1859 = vmatpush1.msra.mxu0 0.0
    %1860 = vmatprep.subr.mxu0 0.0
    %1861 = vmatpush1.msra.mxu0 0.0
    %1862 = vmatprep.subr.mxu0 0.0
    %1863 = vmatpush1.msra.mxu0 0.0
    %1864 = vmatprep.subr.mxu0 0.0
    %1865 = vmatpush1.msra.mxu0 0.0
    %1866 = vmatprep.subr.mxu0 0.0
    %1867 = vmatpush1.msra.mxu0 0.0
    %1868 = vmatprep.subr.mxu0 0.0
    %1869 = vmatpush1.msra.mxu0 0.0
    %1870 = vmatprep.subr.mxu0 0.0
    %1871 = vmatpush1.msra.mxu0 0.0
    %1872 = vmatprep.subr.mxu0 0.0
    %1873 = vmatpush1.msra.mxu0 %v214
    %1874 = vmatprep.subr.mxu0 0.0
    %1875 = vmatpush1.msra.mxu0 %v213
    %1876 = vmatprep.subr.mxu0 0.0
    %1877 = vmatpush1.msra.mxu0 %v212
    %1878 = vmatprep.subr.mxu0 0.0
    %1879 = vmatpush1.msra.mxu0 %v211
    %1880 = vmatprep.subr.mxu0 0.0
    %1881 = vmatpush1.msra.mxu0 %v210
    %1882 = vmatprep.subr.mxu0 0.0
    %1883 = vmatpush1.msra.mxu0 %v209
    %1884 = vmatprep.subr.mxu0 0.0
    %1885 = vmatpush1.msra.mxu0 %v208
    %1886 = vmatprep.subr.mxu0 0.0
    %1887 = vmatpush1.msra.mxu0 %v207
    %1888 = vmatprep.subr.mxu0 0.0
    %1889 = vmatpush2.msra.mxu0 0.0
    %1890 = vmatprep.subr.mxu0 0.0
    %1891 = vmatpush2.msra.mxu0 0.0
    %1892 = vmatprep.subr.mxu0 0.0
    %1893 = vmatpush2.msra.mxu0 0.0
    %1894 = vmatprep.subr.mxu0 0.0
    %1895 = vmatpush2.msra.mxu0 0.0
    %1896 = vmatprep.subr.mxu0 0.0
    %1897 = vmatpush2.msra.mxu0 0.0
    %1898 = vmatprep.subr.mxu0 0.0
    %1899 = vmatpush2.msra.mxu0 0.0
    %1900 = vmatprep.subr.mxu0 0.0
    %1901 = vmatpush2.msra.mxu0 0.0
    %1902 = vmatprep.subr.mxu0 0.0
    %1903 = vmatpush2.msra.mxu0 0.0
    %1904 = vmatprep.subr.mxu0 0.0
    %1905 = vmatpush2.msra.mxu0 0.0
    %1906 = vmatprep.subr.mxu0 0.0
    %1907 = vmatpush2.msra.mxu0 0.0
    %1908 = vmatprep.subr.mxu0 0.0
    %1909 = vmatpush2.msra.mxu0 0.0
    %1910 = vmatprep.subr.mxu0 0.0
    %1911 = vmatpush2.msra.mxu0 0.0
    %1912 = vmatprep.subr.mxu0 0.0
    %1913 = vmatpush2.msra.mxu0 0.0
    %1914 = vmatprep.subr.mxu0 0.0
    %1915 = vmatpush2.msra.mxu0 0.0
    %1916 = vmatprep.subr.mxu0 0.0
    %1917 = vmatpush2.msra.mxu0 0.0
    %1918 = vmatprep.subr.mxu0 0.0
    %1919 = vmatpush2.msra.mxu0 0.0
    %1920 = vmatprep.mubr.f32.mxu0 0.0
    %1921 = vmatmul.mubr.f32.gmra.mxu0 %v1854
    %v1922 = vpop.f32.mrf.mxu0
    %v1923 = vadd.f32 %v220, %v1922
    %v1924 = vpop.f32.mrf.mxu0
    %1925 = vdwg.mxu0
    %v1926 = vxor.u32 %v1923, 2147483648
    %v1927 = vmul.f32 %v1926, 1.442695
    %v1928 = vpow.pop %v1927
    %v1929 = vadd.f32 %v1928, 1.0
    %v1930 = vrcp.pop %v1929
    %v1931 = vmul.f32 1.0, %v1930
    %v1932 = vtanh.pop %v1923
    %v1933 = vmul.f32 %v1931, %v1693
    %1935 = vrot.lane.b32.xlu0 %v1932, 32
    %v1936 = vpop.permute.xlu0 %1935
    %v1938 = vmul.f32 %v1931, %v1936
    %1940 = vrot.lane.b32.xlu0 %v1938, 32
    %v1941 = vpop.permute.xlu0 %1940
    %v1943 = vadd.f32 %v1933, %v1941
    %v1944 = vtanh.pop %v1943
    %1946 = vrot.lane.b32.xlu0 %v1944, 32
    %v1947 = vpop.permute.xlu0 %1946
    %v1949 = vmul.f32 %v1931, %v1947
    %v1950 = vrot.slane %v1836, 6
    %v1951 = vrot.slane %v1837, 5
    %v1952 = vsel %vm353, %v1951, %v1950
    %1953 = vrot.lane.b32.xlu0 %v1952, 64
    %v1954 = vpop.permute.xlu0 %1953
    %v1955 = vsel %vm222, %v1954, 0
    %1957 = vmatprep.subr.mxu0 0.0
    %1958 = vmatpush1.msra.mxu0 0.0
    %1959 = vmatprep.subr.mxu0 0.0
    %1960 = vmatpush1.msra.mxu0 0.0
    %1961 = vmatprep.subr.mxu0 0.0
    %1962 = vmatpush1.msra.mxu0 0.0
    %1963 = vmatprep.subr.mxu0 0.0
    %1964 = vmatpush1.msra.mxu0 0.0
    %1965 = vmatprep.subr.mxu0 0.0
    %1966 = vmatpush1.msra.mxu0 0.0
    %1967 = vmatprep.subr.mxu0 0.0
    %1968 = vmatpush1.msra.mxu0 0.0
    %1969 = vmatprep.subr.mxu0 0.0
    %1970 = vmatpush1.msra.mxu0 0.0
    %1971 = vmatprep.subr.mxu0 0.0
    %1972 = vmatpush1.msra.mxu0 0.0
    %1973 = vmatprep.subr.mxu0 0.0
    %1974 = vmatpush1.msra.mxu0 0.0
    %1975 = vmatprep.subr.mxu0 0.0
    %1976 = vmatpush1.msra.mxu0 0.0
    %1977 = vmatprep.subr.mxu0 0.0
    %1978 = vmatpush1.msra.mxu0 0.0
    %1979 = vmatprep.subr.mxu0 0.0
    %1980 = vmatpush1.msra.mxu0 0.0
    %1981 = vmatprep.subr.mxu0 0.0
    %1982 = vmatpush1.msra.mxu0 %v206
    %1983 = vmatprep.subr.mxu0 0.0
    %1984 = vmatpush1.msra.mxu0 %v205
    %1985 = vmatprep.subr.mxu0 0.0
    %1986 = vmatpush1.msra.mxu0 %v204
    %1987 = vmatprep.subr.mxu0 0.0
    %1988 = vmatpush1.msra.mxu0 %v203
    %1989 = vmatprep.subr.mxu0 0.0
    %1990 = vmatpush2.msra.mxu0 0.0
    %1991 = vmatprep.subr.mxu0 0.0
    %1992 = vmatpush2.msra.mxu0 0.0
    %1993 = vmatprep.subr.mxu0 0.0
    %1994 = vmatpush2.msra.mxu0 0.0
    %1995 = vmatprep.subr.mxu0 0.0
    %1996 = vmatpush2.msra.mxu0 0.0
    %1997 = vmatprep.subr.mxu0 0.0
    %1998 = vmatpush2.msra.mxu0 0.0
    %1999 = vmatprep.subr.mxu0 0.0
    %2000 = vmatpush2.msra.mxu0 0.0
    %2001 = vmatprep.subr.mxu0 0.0
    %2002 = vmatpush2.msra.mxu0 0.0
    %2003 = vmatprep.subr.mxu0 0.0
    %2004 = vmatpush2.msra.mxu0 0.0
    %2005 = vmatprep.subr.mxu0 0.0
    %2006 = vmatpush2.msra.mxu0 0.0
    %2007 = vmatprep.subr.mxu0 0.0
    %2008 = vmatpush2.msra.mxu0 0.0
    %2009 = vmatprep.subr.mxu0 0.0
    %2010 = vmatpush2.msra.mxu0 0.0
    %2011 = vmatprep.subr.mxu0 0.0
    %2012 = vmatpush2.msra.mxu0 0.0
    %2013 = vmatprep.subr.mxu0 0.0
    %2014 = vmatpush2.msra.mxu0 0.0
    %2015 = vmatprep.subr.mxu0 0.0
    %2016 = vmatpush2.msra.mxu0 0.0
    %2017 = vmatprep.subr.mxu0 0.0
    %2018 = vmatpush2.msra.mxu0 0.0
    %2019 = vmatprep.subr.mxu0 0.0
    %2020 = vmatpush2.msra.mxu0 0.0
    %2021 = vmatprep.mubr.f32.mxu0 0.0
    %2022 = vmatmul.mubr.f32.gmra.mxu0 %v1955
    %v2023 = vpop.f32.mrf.mxu0
    %v2024 = vadd.f32 0.0, %v2023
    %v2025 = vpop.f32.mrf.mxu0
    %2026 = vdwg.mxu0
    %v2028 = vrot.slane %v2024, 1
    %v2029 = vrot.slane %v2024, 2
    %v2032 = vadd.f32 %v195, %v2028
    %v2033 = vadd.f32 %v200, %v2029
    %v2034 = vxor.u32 %v2032, 2147483648
    %v2035 = vxor.u32 %v2033, 2147483648
    %v2036 = vmul.f32 %v2034, 1.442695
    %v2037 = vpow.pop %v2036
    %v2038 = vmul.f32 %v2035, 1.442695
    %v2039 = vpow.pop %v2038
    %v2040 = vadd.f32 %v2037, 1.0
    %v2041 = vadd.f32 %v2039, 1.0
    %v2042 = vrcp.pop %v2040
    %v2043 = vmul.f32 1.0, %v2042
    %v2044 = vrcp.pop %v2041
    %v2045 = vmul.f32 1.0, %v2044
    %v2046 = vtanh.pop %v2032
    %v2047 = vtanh.pop %v2033
    %v2050 = vrot.slane %v1824, 7
    %v2051 = vrot.slane %v1825, 7
    %v2054 = vmul.f32 %v2043, %v2050
    %v2055 = vmul.f32 %v2045, %v2051
    %2058 = vrot.lane.b32.xlu0 %v2046, 32
    %v2059 = vpop.permute.xlu0 %2058
    %2060 = vrot.lane.b32.xlu0 %v2047, 32
    %v2061 = vpop.permute.xlu0 %2060
    %v2064 = vmul.f32 %v2043, %v2059
    %v2065 = vmul.f32 %v2045, %v2061
    %2068 = vrot.lane.b32.xlu0 %v2064, 32
    %v2069 = vpop.permute.xlu0 %2068
    %2070 = vrot.lane.b32.xlu0 %v2065, 32
    %v2071 = vpop.permute.xlu0 %2070
    %v2074 = vadd.f32 %v2054, %v2069
    %v2075 = vadd.f32 %v2055, %v2071
    %v2076 = vtanh.pop %v2074
    %v2077 = vtanh.pop %v2075
    %2080 = vrot.lane.b32.xlu0 %v2076, 32
    %v2081 = vpop.permute.xlu0 %2080
    %2082 = vrot.lane.b32.xlu0 %v2077, 32
    %v2083 = vpop.permute.xlu0 %2082
    %v2086 = vmul.f32 %v2043, %v2081
    %v2087 = vmul.f32 %v2045, %v2083
    %v2090 = vrot.slane %v2087, 7
    %2091 = vrot.lane.b32.xlu0 %v2086, 64
    %v2092 = vpop.permute.xlu0 %2091
    %2093 = vrot.lane.b32.xlu0 %v2090, 64
    %v2094 = vpop.permute.xlu0 %2093
    %v2098 = vrot.slane %v1949, 1
    %2099 = vrot.lane.b32.xlu0 %v2098, 96
    %v2100 = vpop.permute.xlu0 %2099
    %v2102 = vsel %vm222, %v2092, %v2100
    %v2103 = vsel %vm222, %v2094, %v2100
    %vm2106 = vcmask 1040384
    %v2107 = vrot.slane %v2102, 7
    %v2108 = vrot.slane %v2103, 7
    %v2109 = vsel %vm2106, %v2107, %v2108
    %v2110 = vsel %vm359, %v2109, 0
    %2112 = vmatprep.subr.mxu0 0.0
    %2113 = vmatpush1.msra.mxu0 0.0
    %2114 = vmatprep.subr.mxu0 0.0
    %2115 = vmatpush1.msra.mxu0 0.0
    %2116 = vmatprep.subr.mxu0 0.0
    %2117 = vmatpush1.msra.mxu0 0.0
    %2118 = vmatprep.subr.mxu0 0.0
    %2119 = vmatpush1.msra.mxu0 0.0
    %2120 = vmatprep.subr.mxu0 0.0
    %2121 = vmatpush1.msra.mxu0 0.0
    %2122 = vmatprep.subr.mxu0 0.0
    %2123 = vmatpush1.msra.mxu0 0.0
    %2124 = vmatprep.subr.mxu0 0.0
    %2125 = vmatpush1.msra.mxu0 0.0
    %2126 = vmatprep.subr.mxu0 0.0
    %2127 = vmatpush1.msra.mxu0 0.0
    %2128 = vmatprep.subr.mxu0 0.0
    %2129 = vmatpush1.msra.mxu0 %v214
    %2130 = vmatprep.subr.mxu0 0.0
    %2131 = vmatpush1.msra.mxu0 %v213
    %2132 = vmatprep.subr.mxu0 0.0
    %2133 = vmatpush1.msra.mxu0 %v212
    %2134 = vmatprep.subr.mxu0 0.0
    %2135 = vmatpush1.msra.mxu0 %v211
    %2136 = vmatprep.subr.mxu0 0.0
    %2137 = vmatpush1.msra.mxu0 %v210
    %2138 = vmatprep.subr.mxu0 0.0
    %2139 = vmatpush1.msra.mxu0 %v209
    %2140 = vmatprep.subr.mxu0 0.0
    %2141 = vmatpush1.msra.mxu0 %v208
    %2142 = vmatprep.subr.mxu0 0.0
    %2143 = vmatpush1.msra.mxu0 %v207
    %2144 = vmatprep.subr.mxu0 0.0
    %2145 = vmatpush2.msra.mxu0 0.0
    %2146 = vmatprep.subr.mxu0 0.0
    %2147 = vmatpush2.msra.mxu0 0.0
    %2148 = vmatprep.subr.mxu0 0.0
    %2149 = vmatpush2.msra.mxu0 0.0
    %2150 = vmatprep.subr.mxu0 0.0
    %2151 = vmatpush2.msra.mxu0 0.0
    %2152 = vmatprep.subr.mxu0 0.0
    %2153 = vmatpush2.msra.mxu0 0.0
    %2154 = vmatprep.subr.mxu0 0.0
    %2155 = vmatpush2.msra.mxu0 0.0
    %2156 = vmatprep.subr.mxu0 0.0
    %2157 = vmatpush2.msra.mxu0 0.0
    %2158 = vmatprep.subr.mxu0 0.0
    %2159 = vmatpush2.msra.mxu0 0.0
    %2160 = vmatprep.subr.mxu0 0.0
    %2161 = vmatpush2.msra.mxu0 0.0
    %2162 = vmatprep.subr.mxu0 0.0
    %2163 = vmatpush2.msra.mxu0 0.0
    %2164 = vmatprep.subr.mxu0 0.0
    %2165 = vmatpush2.msra.mxu0 0.0
    %2166 = vmatprep.subr.mxu0 0.0
    %2167 = vmatpush2.msra.mxu0 0.0
    %2168 = vmatprep.subr.mxu0 0.0
    %2169 = vmatpush2.msra.mxu0 0.0
    %2170 = vmatprep.subr.mxu0 0.0
    %2171 = vmatpush2.msra.mxu0 0.0
    %2172 = vmatprep.subr.mxu0 0.0
    %2173 = vmatpush2.msra.mxu0 0.0
    %2174 = vmatprep.subr.mxu0 0.0
    %2175 = vmatpush2.msra.mxu0 0.0
    %2176 = vmatprep.mubr.f32.mxu0 0.0
    %2177 = vmatmul.mubr.f32.gmra.mxu0 %v2110
    %v2178 = vpop.f32.mrf.mxu0
    %v2179 = vadd.f32 %v220, %v2178
    %v2180 = vpop.f32.mrf.mxu0
    %2181 = vdwg.mxu0
    %v2182 = vxor.u32 %v2179, 2147483648
    %v2183 = vmul.f32 %v2182, 1.442695
    %v2184 = vpow.pop %v2183
    %v2185 = vadd.f32 %v2184, 1.0
    %v2186 = vrcp.pop %v2185
    %v2187 = vmul.f32 1.0, %v2186
    %v2188 = vtanh.pop %v2179
    %v2189 = vmul.f32 %v2187, %v1943
    %2191 = vrot.lane.b32.xlu0 %v2188, 32
    %v2192 = vpop.permute.xlu0 %2191
    %v2194 = vmul.f32 %v2187, %v2192
    %2196 = vrot.lane.b32.xlu0 %v2194, 32
    %v2197 = vpop.permute.xlu0 %2196
    %v2199 = vadd.f32 %v2189, %v2197
    %v2200 = vtanh.pop %v2199
    %2202 = vrot.lane.b32.xlu0 %v2200, 32
    %v2203 = vpop.permute.xlu0 %2202
    %v2205 = vmul.f32 %v2187, %v2203
    %v2206 = vld [vmem:[#allocation8] sm:$0xff]
    %v2207 = vld [vmem:[#allocation8 + $0x8] sm:$0xff]
    %v2208 = vld [vmem:[#allocation8 + $0x10] sm:$0xff]
    %v2209 = vld [vmem:[#allocation8 + $0x18] sm:$0xff]
    %v2210 = vld [vmem:[%s7] sm:$0x1]
    %v2212 = vlaneseq
    %v2213 = vshrl.u32 %v2212, 7
    %v2214 = vsub.s32 0, %v2213
    %v2215 = vrot.slane %v2210, %v2214
    %2218 = vrot.lane.b32.xlu0 %v2205, 64
    %v2219 = vpop.permute.xlu0 %2218
    %v2220 = vsel %vm222, %v2219, 0
    %2222 = vmatprep.subr.mxu0 0.0
    %2223 = vmatpush1.msra.mxu0 0.0
    %2224 = vmatprep.subr.mxu0 0.0
    %2225 = vmatpush1.msra.mxu0 0.0
    %2226 = vmatprep.subr.mxu0 0.0
    %2227 = vmatpush1.msra.mxu0 0.0
    %2228 = vmatprep.subr.mxu0 0.0
    %2229 = vmatpush1.msra.mxu0 0.0
    %2230 = vmatprep.subr.mxu0 0.0
    %2231 = vmatpush1.msra.mxu0 0.0
    %2232 = vmatprep.subr.mxu0 0.0
    %2233 = vmatpush1.msra.mxu0 0.0
    %2234 = vmatprep.subr.mxu0 0.0
    %2235 = vmatpush1.msra.mxu0 0.0
    %2236 = vmatprep.subr.mxu0 0.0
    %2237 = vmatpush1.msra.mxu0 0.0
    %2238 = vmatprep.subr.mxu0 0.0
    %2239 = vmatpush1.msra.mxu0 0.0
    %2240 = vmatprep.subr.mxu0 0.0
    %2241 = vmatpush1.msra.mxu0 0.0
    %2242 = vmatprep.subr.mxu0 0.0
    %2243 = vmatpush1.msra.mxu0 0.0
    %2244 = vmatprep.subr.mxu0 0.0
    %2245 = vmatpush1.msra.mxu0 0.0
    %2246 = vmatprep.subr.mxu0 0.0
    %2247 = vmatpush1.msra.mxu0 %v2209
    %2248 = vmatprep.subr.mxu0 0.0
    %2249 = vmatpush1.msra.mxu0 %v2208
    %2250 = vmatprep.subr.mxu0 0.0
    %2251 = vmatpush1.msra.mxu0 %v2207
    %2252 = vmatprep.subr.mxu0 0.0
    %2253 = vmatpush1.msra.mxu0 %v2206
    %2254 = vmatprep.subr.mxu0 0.0
    %2255 = vmatpush2.msra.mxu0 0.0
    %2256 = vmatprep.subr.mxu0 0.0
    %2257 = vmatpush2.msra.mxu0 0.0
    %2258 = vmatprep.subr.mxu0 0.0
    %2259 = vmatpush2.msra.mxu0 0.0
    %2260 = vmatprep.subr.mxu0 0.0
    %2261 = vmatpush2.msra.mxu0 0.0
    %2262 = vmatprep.subr.mxu0 0.0
    %2263 = vmatpush2.msra.mxu0 0.0
    %2264 = vmatprep.subr.mxu0 0.0
    %2265 = vmatpush2.msra.mxu0 0.0
    %2266 = vmatprep.subr.mxu0 0.0
    %2267 = vmatpush2.msra.mxu0 0.0
    %2268 = vmatprep.subr.mxu0 0.0
    %2269 = vmatpush2.msra.mxu0 0.0
    %2270 = vmatprep.subr.mxu0 0.0
    %2271 = vmatpush2.msra.mxu0 0.0
    %2272 = vmatprep.subr.mxu0 0.0
    %2273 = vmatpush2.msra.mxu0 0.0
    %2274 = vmatprep.subr.mxu0 0.0
    %2275 = vmatpush2.msra.mxu0 0.0
    %2276 = vmatprep.subr.mxu0 0.0
    %2277 = vmatpush2.msra.mxu0 0.0
    %2278 = vmatprep.subr.mxu0 0.0
    %2279 = vmatpush2.msra.mxu0 0.0
    %2280 = vmatprep.subr.mxu0 0.0
    %2281 = vmatpush2.msra.mxu0 0.0
    %2282 = vmatprep.subr.mxu0 0.0
    %2283 = vmatpush2.msra.mxu0 0.0
    %2284 = vmatprep.subr.mxu0 0.0
    %2285 = vmatpush2.msra.mxu0 0.0
    %2286 = vmatprep.mubr.f32.mxu0 0.0
    %2287 = vmatmul.mubr.f32.gmra.mxu0 %v2220
    %v2288 = vpop.f32.mrf.mxu0
    %v2289 = vadd.f32 %v2215, %v2288
    %v2290 = vpop.f32.mrf.mxu0
    %2291 = vdwg.mxu0
    %v2292 = vmax.f32 %v2289, 0.0
    %v2293 = vld [vmem:[#allocation10] sm:$0xff]
    %v2294 = vld [vmem:[#allocation10 + $0x8] sm:$0xff]
    %v2295 = vld [vmem:[#allocation10 + $0x10] sm:$0xff]
    %v2296 = vld [vmem:[#allocation10 + $0x18] sm:$0xff]
    %v2297 = vld [vmem:[%s9] sm:$0x1]
    %v2299 = vlaneseq
    %v2300 = vshrl.u32 %v2299, 7
    %v2301 = vsub.s32 0, %v2300
    %v2302 = vrot.slane %v2297, %v2301
    %v2305 = vsel %vm222, %v2292, 0
    %2307 = vmatprep.subr.mxu0 0.0
    %2308 = vmatpush1.msra.mxu0 0.0
    %2309 = vmatprep.subr.mxu0 0.0
    %2310 = vmatpush1.msra.mxu0 0.0
    %2311 = vmatprep.subr.mxu0 0.0
    %2312 = vmatpush1.msra.mxu0 0.0
    %2313 = vmatprep.subr.mxu0 0.0
    %2314 = vmatpush1.msra.mxu0 0.0
    %2315 = vmatprep.subr.mxu0 0.0
    %2316 = vmatpush1.msra.mxu0 0.0
    %2317 = vmatprep.subr.mxu0 0.0
    %2318 = vmatpush1.msra.mxu0 0.0
    %2319 = vmatprep.subr.mxu0 0.0
    %2320 = vmatpush1.msra.mxu0 0.0
    %2321 = vmatprep.subr.mxu0 0.0
    %2322 = vmatpush1.msra.mxu0 0.0
    %2323 = vmatprep.subr.mxu0 0.0
    %2324 = vmatpush1.msra.mxu0 0.0
    %2325 = vmatprep.subr.mxu0 0.0
    %2326 = vmatpush1.msra.mxu0 0.0
    %2327 = vmatprep.subr.mxu0 0.0
    %2328 = vmatpush1.msra.mxu0 0.0
    %2329 = vmatprep.subr.mxu0 0.0
    %2330 = vmatpush1.msra.mxu0 0.0
    %2331 = vmatprep.subr.mxu0 0.0
    %2332 = vmatpush1.msra.mxu0 %v2296
    %2333 = vmatprep.subr.mxu0 0.0
    %2334 = vmatpush1.msra.mxu0 %v2295
    %2335 = vmatprep.subr.mxu0 0.0
    %2336 = vmatpush1.msra.mxu0 %v2294
    %2337 = vmatprep.subr.mxu0 0.0
    %2338 = vmatpush1.msra.mxu0 %v2293
    %2339 = vmatprep.subr.mxu0 0.0
    %2340 = vmatpush2.msra.mxu0 0.0
    %2341 = vmatprep.subr.mxu0 0.0
    %2342 = vmatpush2.msra.mxu0 0.0
    %2343 = vmatprep.subr.mxu0 0.0
    %2344 = vmatpush2.msra.mxu0 0.0
    %2345 = vmatprep.subr.mxu0 0.0
    %2346 = vmatpush2.msra.mxu0 0.0
    %2347 = vmatprep.subr.mxu0 0.0
    %2348 = vmatpush2.msra.mxu0 0.0
    %2349 = vmatprep.subr.mxu0 0.0
    %2350 = vmatpush2.msra.mxu0 0.0
    %2351 = vmatprep.subr.mxu0 0.0
    %2352 = vmatpush2.msra.mxu0 0.0
    %2353 = vmatprep.subr.mxu0 0.0
    %2354 = vmatpush2.msra.mxu0 0.0
    %2355 = vmatprep.subr.mxu0 0.0
    %2356 = vmatpush2.msra.mxu0 0.0
    %2357 = vmatprep.subr.mxu0 0.0
    %2358 = vmatpush2.msra.mxu0 0.0
    %2359 = vmatprep.subr.mxu0 0.0
    %2360 = vmatpush2.msra.mxu0 0.0
    %2361 = vmatprep.subr.mxu0 0.0
    %2362 = vmatpush2.msra.mxu0 0.0
    %2363 = vmatprep.subr.mxu0 0.0
    %2364 = vmatpush2.msra.mxu0 0.0
    %2365 = vmatprep.subr.mxu0 0.0
    %2366 = vmatpush2.msra.mxu0 0.0
    %2367 = vmatprep.subr.mxu0 0.0
    %2368 = vmatpush2.msra.mxu0 0.0
    %2369 = vmatprep.subr.mxu0 0.0
    %2370 = vmatpush2.msra.mxu0 0.0
    %2371 = vmatprep.mubr.f32.mxu0 0.0
    %2372 = vmatmul.mubr.f32.gmra.mxu0 %v2305
    %v2373 = vpop.f32.mrf.mxu0
    %v2374 = vadd.f32 %v2302, %v2373
    %v2375 = vpop.f32.mrf.mxu0
    %2376 = vdwg.mxu0
    %v2377 = vmax.f32 %v2374, 0.0
    %v2378 = vld [vmem:[%s10] sm:$0xff]
    %v2379 = vld [vmem:[%s10 + $0x8] sm:$0xff]
    %v2380 = vld [vmem:[%s10 + $0x10] sm:$0xff]
    %v2381 = vld [vmem:[%s10 + $0x18] sm:$0xff]
    %v2382 = vld [vmem:[%s11] sm:$0x1]
    %v2384 = vlaneseq
    %v2385 = vshrl.u32 %v2384, 7
    %v2386 = vsub.s32 0, %v2385
    %v2387 = vrot.slane %v2382, %v2386
    %v2390 = vsel %vm222, %v2377, 0
    %2392 = vmatprep.subr.mxu0 0.0
    %2393 = vmatpush1.msra.mxu0 0.0
    %2394 = vmatprep.subr.mxu0 0.0
    %2395 = vmatpush1.msra.mxu0 0.0
    %2396 = vmatprep.subr.mxu0 0.0
    %2397 = vmatpush1.msra.mxu0 0.0
    %2398 = vmatprep.subr.mxu0 0.0
    %2399 = vmatpush1.msra.mxu0 0.0
    %2400 = vmatprep.subr.mxu0 0.0
    %2401 = vmatpush1.msra.mxu0 0.0
    %2402 = vmatprep.subr.mxu0 0.0
    %2403 = vmatpush1.msra.mxu0 0.0
    %2404 = vmatprep.subr.mxu0 0.0
    %2405 = vmatpush1.msra.mxu0 0.0
    %2406 = vmatprep.subr.mxu0 0.0
    %2407 = vmatpush1.msra.mxu0 0.0
    %2408 = vmatprep.subr.mxu0 0.0
    %2409 = vmatpush1.msra.mxu0 0.0
    %2410 = vmatprep.subr.mxu0 0.0
    %2411 = vmatpush1.msra.mxu0 0.0
    %2412 = vmatprep.subr.mxu0 0.0
    %2413 = vmatpush1.msra.mxu0 0.0
    %2414 = vmatprep.subr.mxu0 0.0
    %2415 = vmatpush1.msra.mxu0 0.0
    %2416 = vmatprep.subr.mxu0 0.0
    %2417 = vmatpush1.msra.mxu0 %v2381
    %2418 = vmatprep.subr.mxu0 0.0
    %2419 = vmatpush1.msra.mxu0 %v2380
    %2420 = vmatprep.subr.mxu0 0.0
    %2421 = vmatpush1.msra.mxu0 %v2379
    %2422 = vmatprep.subr.mxu0 0.0
    %2423 = vmatpush1.msra.mxu0 %v2378
    %2424 = vmatprep.subr.mxu0 0.0
    %2425 = vmatpush2.msra.mxu0 0.0
    %2426 = vmatprep.subr.mxu0 0.0
    %2427 = vmatpush2.msra.mxu0 0.0
    %2428 = vmatprep.subr.mxu0 0.0
    %2429 = vmatpush2.msra.mxu0 0.0
    %2430 = vmatprep.subr.mxu0 0.0
    %2431 = vmatpush2.msra.mxu0 0.0
    %2432 = vmatprep.subr.mxu0 0.0
    %2433 = vmatpush2.msra.mxu0 0.0
    %2434 = vmatprep.subr.mxu0 0.0
    %2435 = vmatpush2.msra.mxu0 0.0
    %2436 = vmatprep.subr.mxu0 0.0
    %2437 = vmatpush2.msra.mxu0 0.0
    %2438 = vmatprep.subr.mxu0 0.0
    %2439 = vmatpush2.msra.mxu0 0.0
    %2440 = vmatprep.subr.mxu0 0.0
    %2441 = vmatpush2.msra.mxu0 0.0
    %2442 = vmatprep.subr.mxu0 0.0
    %2443 = vmatpush2.msra.mxu0 0.0
    %2444 = vmatprep.subr.mxu0 0.0
    %2445 = vmatpush2.msra.mxu0 0.0
    %2446 = vmatprep.subr.mxu0 0.0
    %2447 = vmatpush2.msra.mxu0 0.0
    %2448 = vmatprep.subr.mxu0 0.0
    %2449 = vmatpush2.msra.mxu0 0.0
    %2450 = vmatprep.subr.mxu0 0.0
    %2451 = vmatpush2.msra.mxu0 0.0
    %2452 = vmatprep.subr.mxu0 0.0
    %2453 = vmatpush2.msra.mxu0 0.0
    %2454 = vmatprep.subr.mxu0 0.0
    %2455 = vmatpush2.msra.mxu0 0.0
    %2456 = vmatprep.mubr.f32.mxu0 0.0
    %2457 = vmatmul.mubr.f32.gmra.mxu0 %v2390
    %v2458 = vpop.f32.mrf.mxu0
    %v2459 = vadd.f32 %v2387, %v2458
    %v2460 = vpop.f32.mrf.mxu0
    %2461 = vdwg.mxu0
    %vm2462 = vcmask 25600
    %2463 = vst.msk [vmem:[#allocation11] sm:$0x3] %vm2462, %v2459
    // Predicated region
    $region70: #{tpu_custom_call.1} parent=1 // pred_check
      _
    $region71: #{tpu_custom_call.1} parent=1 // pred_check_branch
      %2465 = sbr.rel (0) target = $region73
    $region72: #{tpu_custom_call.1} parent=1 // pred_region
      %s2467 = ssub.s32 32, 32
      %2468 = vsyncadd [#allocation4], %s2467
      %s2470 = sshll.u32 [#allocation11], 4
      %s2471 = int_to_ptr.vmem [resolvable:$true] %s2470
      %2473 = dma.vmem_to_hbm [thread:$0]  %s2471, 32, %s12, [#allocation4]
    $region73: #{tpu_custom_call.1} parent=1 // pred_fallthru
      _
    // Predicated region
    $region74: #{tpu_custom_call.1} parent=1 // pred_check
      _
    $region75: #{tpu_custom_call.1} parent=1 // pred_check_branch
      %2475 = sbr.rel (0) target = $region77
    $region76: #{tpu_custom_call.1} parent=1 // pred_region
      %2476 = dma.done [#allocation4], 32
    $region77: #{tpu_custom_call.1} parent=1 // pred_fallthru
      _
    %2477 = vsyncpa [#allocation3], 1
    %2478 = vsyncpa [#allocation6], 1
    %2479 = vsyncpa [#allocation9], 1
    %2480 = vsyncpa [#allocation4], 1

</llo_original>
